<compile_context>
chip_gen: v7x
topology: tpu7x:2x2x1
jax: 0.10.0
libtpu: 0.0.40
codegen_flags: <defaults>
</compile_context>

<pallas_src>
import jax
import jax.numpy as jnp
from jax.experimental import pallas as pl
from jax.experimental.pallas import tpu as pltpu


# -----------------------------------------------------------------------------
# Fused Pallas kernel: patch-embed + (cluster1 + cluster2) + (ema1 + ema2)
# -----------------------------------------------------------------------------
def _fused_featurizer_kernel(p_ref, pew_ref, peb_ref, wf_ref, bh_ref,
                             wouth_ref, bout_ref, feat_ref, code_ref):
    # p_ref:    (TM, P)      bf16  flattened patches for TM tokens
    # pew_ref:  (P, C)       bf16  patch-embed weight
    # peb_ref:  (1, C)       f32
    # wf_ref:   (C, 2C+128)  bf16  [w2a | ema_w2a | w1(pad) | ema_w1(pad)]
    # bh_ref:   (1, 2C)      f32   [b2a | ema_b2a]
    # wouth_ref:(2C, 128)    bf16  rows[0:C]xcols[0:D]=w2b, rows[C:2C]xcols[D:2D]=ema_w2b
    # bout_ref: (1, 128)     f32   [b1+b2b | ema_b1+ema_b2b | 0...]
    # feat_ref: (TM, C)      bf16  backbone tokens (image_feat)
    # code_ref: (TM, 128)    f32   packed [code | code_ema | pad]
    two_c = bh_ref.shape[1]

    # ---- backbone stand-in: patch embedding (f32 accumulation on MXU) --------
    tok = jnp.dot(p_ref[...], pew_ref[...],
                  preferred_element_type=jnp.float32) + peb_ref[...]
    feat_ref[...] = tok.astype(feat_ref.dtype)      # bf16 store: half the HBM write

    x = tok.astype(jnp.bfloat16)

    # ---- single fused x-side matmul: [hidden(c2|ema2) | linear(c1|ema1)] -----
    y = jnp.dot(x, wf_ref[...], preferred_element_type=jnp.float32)
    # split at a 128-lane boundary (2C = 768): free, no cross-lane movement
    h = jnp.maximum(y[:, :two_c] + bh_ref[...], 0.0).astype(jnp.bfloat16)

    # ---- packed output heads: code in lanes [0:D], code_ema in [D:2D] --------
    out = y[:, two_c:] + jnp.dot(h, wouth_ref[...],
                                 preferred_element_type=jnp.float32)
    code_ref[...] = (out + bout_ref[...]).astype(code_ref.dtype)


def fused_featurizer(patches_bf16, pe_w, pe_b, w_fused, b_h, w_out_h, b_out,
                     *, tm):
    # patches_bf16: (T, P) bf16, T a multiple of tm
    T, P = patches_bf16.shape
    C = pe_w.shape[1]
    NF = w_fused.shape[1]         # 2C + 128
    NC = b_out.shape[1]           # 128 (lane-dense packed code output)
    grid = (T // tm,)

    flops = 2 * T * (P * C + C * NF + 2 * C * NC)
    bytes_accessed = (patches_bf16.size * 2 + pe_w.size * 2 + w_fused.size * 2
                      + w_out_h.size * 2
                      + (pe_b.size + b_h.size + b_out.size) * 4
                      + T * C * 2 + T * NC * 4)

    return pl.pallas_call(
        _fused_featurizer_kernel,
        out_shape=(jax.ShapeDtypeStruct((T, C), jnp.bfloat16),
                   jax.ShapeDtypeStruct((T, NC), jnp.float32)),
        grid_spec=pltpu.PrefetchScalarGridSpec(
            num_scalar_prefetch=0,
            grid=grid,
            in_specs=[
                pl.BlockSpec((tm, P), lambda i: (i, 0)),
                pl.BlockSpec((P, C), lambda i: (0, 0)),
                pl.BlockSpec((1, C), lambda i: (0, 0)),
                pl.BlockSpec((C, NF), lambda i: (0, 0)),
                pl.BlockSpec((1, 2 * C), lambda i: (0, 0)),
                pl.BlockSpec((2 * C, NC), lambda i: (0, 0)),
                pl.BlockSpec((1, NC), lambda i: (0, 0)),
            ],
            out_specs=[
                pl.BlockSpec((tm, C), lambda i: (i, 0)),
                pl.BlockSpec((tm, NC), lambda i: (i, 0)),
            ],
        ),
        compiler_params=pltpu.CompilerParams(
            dimension_semantics=("parallel",)),
        cost_estimate=pl.CostEstimate(flops=int(flops), transcendentals=0,
                                      bytes_accessed=int(bytes_accessed)),
    )(patches_bf16, pe_w, pe_b, w_fused, b_h, w_out_h, b_out)


# -----------------------------------------------------------------------------
# DinoFeaturizer forward (eval path)
# -----------------------------------------------------------------------------
class DinoFeaturizerPallas:
    def __init__(self, dim, patch_size=8, n_feats=384, key=jax.random.PRNGKey(0)):
        assert 2 * dim <= 128, "packed code output assumes 2*dim <= 128 lanes"
        self.dim = dim
        self.patch_size = patch_size
        self.n_feats = n_feats

        ks = jax.random.split(key, 10)
        P = 3 * patch_size * patch_size
        s = 0.02
        # synthetic backbone params (stand-in for pretrained DINO ViT)
        self.pe_w = (s * jax.random.normal(ks[0], (P, n_feats))).astype(jnp.float32)
        self.pe_b = jnp.zeros((1, n_feats), jnp.float32)
        # cluster1: Conv2d(n_feats, dim, 1x1)   (weight stored as (C_in, C_out))
        self.w1 = (s * jax.random.normal(ks[2], (n_feats, dim))).astype(jnp.float32)
        self.b1 = (s * jax.random.normal(ks[3], (1, dim))).astype(jnp.float32)
        # cluster2: Conv2d(n_feats, n_feats, 1x1) -> ReLU -> Conv2d(n_feats, dim, 1x1)
        self.w2a = (s * jax.random.normal(ks[4], (n_feats, n_feats))).astype(jnp.float32)
        self.b2a = (s * jax.random.normal(ks[5], (1, n_feats))).astype(jnp.float32)
        self.w2b = (s * jax.random.normal(ks[6], (n_feats, dim))).astype(jnp.float32)
        self.b2b = (s * jax.random.normal(ks[7], (1, dim))).astype(jnp.float32)
        # ema models are exact copies of cluster1 / cluster2 at init.
        self.ema_w1, self.ema_b1 = self.w1, self.b1
        self.ema_w2a, self.ema_b2a = self.w2a, self.b2a
        self.ema_w2b, self.ema_b2b = self.w2b, self.b2b

        # ------ pre-packed bf16 kernel parameters (built once) ----------------
        NC = 128
        self.pe_w_k = self.pe_w.astype(jnp.bfloat16)
        self.pe_b_k = self.pe_b                                   # (1, C) f32

        # x-side linear heads, zero-padded to 128 lanes
        w_out_x = jnp.zeros((n_feats, NC), jnp.float32)
        w_out_x = w_out_x.at[:, :dim].set(self.w1)
        w_out_x = w_out_x.at[:, dim:2 * dim].set(self.ema_w1)
        # fused x-side weight: [hidden(cluster2 | ema2) | linear heads]  (C, 2C+128)
        self.w_fused = jnp.concatenate(
            [self.w2a, self.ema_w2a, w_out_x], axis=1).astype(jnp.bfloat16)

        self.b_h = jnp.concatenate([self.b2a, self.ema_b2a], axis=1)  # (1, 2C) f32

        w_out_h = jnp.zeros((2 * n_feats, NC), jnp.float32)
        w_out_h = w_out_h.at[:n_feats, :dim].set(self.w2b)
        w_out_h = w_out_h.at[n_feats:, dim:2 * dim].set(self.ema_w2b)
        self.w_out_h = w_out_h.astype(jnp.bfloat16)                # (2C, 128)

        b_out = jnp.zeros((1, NC), jnp.float32)
        b_out = b_out.at[:, :dim].set(self.b1 + self.b2b)
        b_out = b_out.at[:, dim:2 * dim].set(self.ema_b1 + self.ema_b2b)
        self.b_out = b_out                                         # (1, 128) f32

    def _extract_patches(self, img):
        # img: NCHW (B, 3, H, W) -> (B*HW, 3*p*p), channel-major patch flatten
        # (matches PyTorch Conv2d(3, C, p, stride=p) weight flattening order).
        # Cast to bf16 FIRST so the 6-D transpose moves half the bytes.
        # TODO(synk): patch extraction stays in XLA (6-D transpose); not folded
        #             into the kernel.
        B, Cc, H, W = img.shape
        p = self.patch_size
        fh, fw = H // p, W // p
        x = img.astype(jnp.bfloat16).reshape(B, Cc, fh, p, fw, p)
        x = jnp.transpose(x, (0, 2, 4, 1, 3, 5))           # (B, fh, fw, 3, p, p)
        return x.reshape(B * fh * fw, Cc * p * p), fh, fw

    def _pick_tile(self, T):
        # Target 512 tokens per tile; keep >= 2 grid steps so v7x megacore
        # sharding (dimension_semantics=("parallel",)) has work for both TCs.
        tm = 512
        if T < 2 * tm:
            half = (T + 1) // 2
            tm = max(8, ((half + 7) // 8) * 8)
        return tm

    def __call__(self, img):
        assert img.shape[2] % self.patch_size == 0
        assert img.shape[3] % self.patch_size == 0
        B = img.shape[0]
        C, D = self.n_feats, self.dim

        patches, fh, fw = self._extract_patches(img)        # (T, P) bf16
        T = patches.shape[0]

        tm = self._pick_tile(T)
        T_pad = ((T + tm - 1) // tm) * tm
        if T_pad != T:                                       # skipped when T % tm == 0
            patches = jnp.pad(patches, ((0, T_pad - T), (0, 0)))

        # ---- fused backbone + projection heads (Dropout2d identity in eval) --
        feat_tok, code_packed = fused_featurizer(
            patches, self.pe_w_k, self.pe_b_k, self.w_fused, self.b_h,
            self.w_out_h, self.b_out, tm=tm)

        feat_tok = feat_tok[:T]                              # (T, C) bf16
        code_packed = code_packed[:T]                        # (T, 128) f32

        # NCHW transposes: feat stays bf16 (cheapest layout pass); code is tiny.
        image_feat = jnp.transpose(
            feat_tok.reshape(B, fh, fw, C), (0, 3, 1, 2))    # (B, C, fh, fw) bf16
        code = jnp.transpose(
            code_packed[:, :D].reshape(B, fh, fw, D), (0, 3, 1, 2))
        code_ema = jnp.transpose(
            code_packed[:, D:2 * D].reshape(B, fh, fw, D), (0, 3, 1, 2))
        return image_feat, code, code_ema


# -----------------------------------------------------------------------------
# main
# -----------------------------------------------------------------------------
if __name__ == "__main__":
    key = jax.random.PRNGKey(0)
    k_img, k_par = jax.random.split(key)

    B, H, W = 2, 64, 64            # patch 8 -> 8x8 = 64 tokens/img, T = 128
    dim = 32
    img = jax.random.normal(k_img, (B, 3, H, W), dtype=jnp.float32)  # NCHW

    model = DinoFeaturizerPallas(dim=dim, patch_size=8, n_feats=384, key=k_par)
    image_feat, code, code_ema = model(img)
    jax.block_until_ready((image_feat, code, code_ema))

    # ---- pure-JAX reference with the same bf16 cast chain ---------------------
    fh = H // 8
    patches_ref, _, _ = model._extract_patches(img)         # already bf16
    tok_ref = jnp.dot(patches_ref, model.pe_w.astype(jnp.bfloat16),
                      preferred_element_type=jnp.float32) + model.pe_b
    x_bf = tok_ref.astype(jnp.bfloat16)
    h_ref = jnp.dot(x_bf, model.w2a.astype(jnp.bfloat16),
                    preferred_element_type=jnp.float32) + model.b2a
    h_bf = jnp.maximum(h_ref, 0.0).astype(jnp.bfloat16)
    lin_ref = jnp.dot(x_bf, model.w1.astype(jnp.bfloat16),
                      preferred_element_type=jnp.float32) + model.b1
    nl_ref = jnp.dot(h_bf, model.w2b.astype(jnp.bfloat16),
                     preferred_element_type=jnp.float32) + model.b2b
    code_ref_tok = lin_ref + nl_ref

    feat_ref = jnp.transpose(tok_ref.reshape(B, fh, fh, 384), (0, 3, 1, 2))
    code_ref = jnp.transpose(code_ref_tok.reshape(B, fh, fh, dim), (0, 3, 1, 2))

    assert image_feat.shape == (B, 384, fh, fh)
    assert code.shape == (B, dim, fh, fh)
    assert code_ema.shape == (B, dim, fh, fh)
    assert jnp.allclose(image_feat.astype(jnp.float32), feat_ref,
                        atol=1e-2, rtol=2e-2)               # feat stored in bf16
    assert jnp.allclose(code, code_ref, atol=5e-3, rtol=2e-2)
    assert jnp.allclose(code, code_ema, atol=1e-5)   # ema heads are copies at init

    print("KERNEL_OK")
</pallas_src>

<mosaic_0001>
module attributes {stable_mosaic.version = 11 : i64} {
  func.func @_fused_featurizer_kernel(%arg0: i32, %arg1: memref<64x192xbf16, #tpu.memory_space<vmem>>, %arg2: memref<192x384xbf16, #tpu.memory_space<vmem>>, %arg3: memref<1x384xf32, #tpu.memory_space<vmem>>, %arg4: memref<384x896xbf16, #tpu.memory_space<vmem>>, %arg5: memref<1x768xf32, #tpu.memory_space<vmem>>, %arg6: memref<768x128xbf16, #tpu.memory_space<vmem>>, %arg7: memref<1x128xf32, #tpu.memory_space<vmem>>, %arg8: memref<64x384xbf16, #tpu.memory_space<vmem>>, %arg9: memref<64x128xf32, #tpu.memory_space<vmem>>) attributes {dimension_semantics = [#tpu.dimension_semantics<parallel>], iteration_bounds = array<i64: 2>, scalar_prefetch = 0 : i64, scratch_operands = 0 : i64, tpu.core_type = #tpu.core_type<tc>, window_params = [{transform_indices = @transform_0, window_bounds = array<i64: 64, 192>}, {pipeline_mode = #tpu.pipeline_mode<synchronous>, transform_indices = @transform_1, window_bounds = array<i64: 192, 384>}, {pipeline_mode = #tpu.pipeline_mode<synchronous>, transform_indices = @transform_2, window_bounds = array<i64: 1, 384>}, {pipeline_mode = #tpu.pipeline_mode<synchronous>, transform_indices = @transform_3, window_bounds = array<i64: 384, 896>}, {pipeline_mode = #tpu.pipeline_mode<synchronous>, transform_indices = @transform_4, window_bounds = array<i64: 1, 768>}, {pipeline_mode = #tpu.pipeline_mode<synchronous>, transform_indices = @transform_5, window_bounds = array<i64: 768, 128>}, {pipeline_mode = #tpu.pipeline_mode<synchronous>, transform_indices = @transform_6, window_bounds = array<i64: 1, 128>}, {transform_indices = @transform_7, window_bounds = array<i64: 64, 384>}, {transform_indices = @transform_8, window_bounds = array<i64: 64, 128>}]} {
    %c0 = arith.constant 0 : index
    %c0_0 = arith.constant 0 : index
    %0 = vector.load %arg1[%c0, %c0_0] : memref<64x192xbf16, #tpu.memory_space<vmem>>, vector<64x192xbf16>
    %c0_1 = arith.constant 0 : index
    %c0_2 = arith.constant 0 : index
    %1 = vector.load %arg2[%c0_1, %c0_2] : memref<192x384xbf16, #tpu.memory_space<vmem>>, vector<192x384xbf16>
    %cst = arith.constant dense<0.000000e+00> : vector<64x384xf32>
    %2 = tpu.matmul %0, %1, %cst {dimension_numbers = #tpu.dot_dimension_numbers<[1], [0], [0], [1], [0, 0, 1, 1], [], []>} : vector<64x192xbf16>, vector<192x384xbf16>, vector<64x384xf32> -> vector<64x384xf32>
    %c0_3 = arith.constant 0 : index
    %c0_4 = arith.constant 0 : index
    %3 = vector.load %arg3[%c0_3, %c0_4] : memref<1x384xf32, #tpu.memory_space<vmem>>, vector<1x384xf32>
    %4 = vector.broadcast %3 : vector<1x384xf32> to vector<64x384xf32>
    %5 = arith.addf %2, %4 : vector<64x384xf32>
    %6 = arith.truncf %5 : vector<64x384xf32> to vector<64x384xbf16>
    %c0_5 = arith.constant 0 : index
    %c0_6 = arith.constant 0 : index
    %7 = vector.load %arg8[%c0_5, %c0_6] : memref<64x384xbf16, #tpu.memory_space<vmem>>, vector<64x384xbf16>
    tpu.vector_store %arg8[%c0_5, %c0_6], %6 {strides = array<i32>} : memref<64x384xbf16, #tpu.memory_space<vmem>>, vector<64x384xbf16>,
    %8 = arith.truncf %5 : vector<64x384xf32> to vector<64x384xbf16>
    %c0_7 = arith.constant 0 : index
    %c0_8 = arith.constant 0 : index
    %9 = vector.load %arg4[%c0_7, %c0_8] : memref<384x896xbf16, #tpu.memory_space<vmem>>, vector<384x896xbf16>
    %cst_9 = arith.constant dense<0.000000e+00> : vector<64x896xf32>
    %10 = tpu.matmul %8, %9, %cst_9 {dimension_numbers = #tpu.dot_dimension_numbers<[1], [0], [0], [1], [0, 0, 1, 1], [], []>} : vector<64x384xbf16>, vector<384x896xbf16>, vector<64x896xf32> -> vector<64x896xf32>
    %11 = vector.extract_strided_slice %10 {offsets = [0, 0], sizes = [64, 768], strides = [1, 1]} : vector<64x896xf32> to vector<64x768xf32>
    %c0_10 = arith.constant 0 : index
    %c0_11 = arith.constant 0 : index
    %12 = vector.load %arg5[%c0_10, %c0_11] : memref<1x768xf32, #tpu.memory_space<vmem>>, vector<1x768xf32>
    %13 = vector.broadcast %12 : vector<1x768xf32> to vector<64x768xf32>
    %14 = arith.addf %11, %13 : vector<64x768xf32>
    %cst_12 = arith.constant 0.000000e+00 : f32
    %15 = vector.broadcast %cst_12 : f32 to vector<64x768xf32>
    %16 = arith.maximumf %14, %15 : vector<64x768xf32>
    %17 = arith.truncf %16 : vector<64x768xf32> to vector<64x768xbf16>
    %18 = vector.extract_strided_slice %10 {offsets = [0, 768], sizes = [64, 128], strides = [1, 1]} : vector<64x896xf32> to vector<64x128xf32>
    %c0_13 = arith.constant 0 : index
    %c0_14 = arith.constant 0 : index
    %19 = vector.load %arg6[%c0_13, %c0_14] : memref<768x128xbf16, #tpu.memory_space<vmem>>, vector<768x128xbf16>
    %cst_15 = arith.constant dense<0.000000e+00> : vector<64x128xf32>
    %20 = tpu.matmul %17, %19, %cst_15 {dimension_numbers = #tpu.dot_dimension_numbers<[1], [0], [0], [1], [0, 0, 1, 1], [], []>} : vector<64x768xbf16>, vector<768x128xbf16>, vector<64x128xf32> -> vector<64x128xf32>
    %21 = arith.addf %18, %20 : vector<64x128xf32>
    %c0_16 = arith.constant 0 : index
    %c0_17 = arith.constant 0 : index
    %22 = vector.load %arg7[%c0_16, %c0_17] : memref<1x128xf32, #tpu.memory_space<vmem>>, vector<1x128xf32>
    %23 = vector.broadcast %22 : vector<1x128xf32> to vector<64x128xf32>
    %24 = arith.addf %21, %23 : vector<64x128xf32>
    %c0_18 = arith.constant 0 : index
    %c0_19 = arith.constant 0 : index
    %25 = vector.load %arg9[%c0_18, %c0_19] : memref<64x128xf32, #tpu.memory_space<vmem>>, vector<64x128xf32>
    tpu.vector_store %arg9[%c0_18, %c0_19], %24 {strides = array<i32>} : memref<64x128xf32, #tpu.memory_space<vmem>>, vector<64x128xf32>,
    return
  }
  func.func @transform_0(%arg0: i32) -> (i32, i32) {
    %c0_i32 = arith.constant 0 : i32
    %c0_i32_0 = arith.constant 0 : i32
    return %arg0, %c0_i32 : i32, i32
  }
  func.func @transform_1(%arg0: i32) -> (i32, i32) {
    %c0_i32 = arith.constant 0 : i32
    %c0_i32_0 = arith.constant 0 : i32
    %c0_i32_1 = arith.constant 0 : i32
    return %c0_i32, %c0_i32_0 : i32, i32
  }
  func.func @transform_2(%arg0: i32) -> (i32, i32) {
    %c0_i32 = arith.constant 0 : i32
    %c0_i32_0 = arith.constant 0 : i32
    %c0_i32_1 = arith.constant 0 : i32
    return %c0_i32, %c0_i32_0 : i32, i32
  }
  func.func @transform_3(%arg0: i32) -> (i32, i32) {
    %c0_i32 = arith.constant 0 : i32
    %c0_i32_0 = arith.constant 0 : i32
    %c0_i32_1 = arith.constant 0 : i32
    return %c0_i32, %c0_i32_0 : i32, i32
  }
  func.func @transform_4(%arg0: i32) -> (i32, i32) {
    %c0_i32 = arith.constant 0 : i32
    %c0_i32_0 = arith.constant 0 : i32
    %c0_i32_1 = arith.constant 0 : i32
    return %c0_i32, %c0_i32_0 : i32, i32
  }
  func.func @transform_5(%arg0: i32) -> (i32, i32) {
    %c0_i32 = arith.constant 0 : i32
    %c0_i32_0 = arith.constant 0 : i32
    %c0_i32_1 = arith.constant 0 : i32
    return %c0_i32, %c0_i32_0 : i32, i32
  }
  func.func @transform_6(%arg0: i32) -> (i32, i32) {
    %c0_i32 = arith.constant 0 : i32
    %c0_i32_0 = arith.constant 0 : i32
    %c0_i32_1 = arith.constant 0 : i32
    return %c0_i32, %c0_i32_0 : i32, i32
  }
  func.func @transform_7(%arg0: i32) -> (i32, i32) {
    %c0_i32 = arith.constant 0 : i32
    %c0_i32_0 = arith.constant 0 : i32
    return %arg0, %c0_i32 : i32, i32
  }
  func.func @transform_8(%arg0: i32) -> (i32, i32) {
    %c0_i32 = arith.constant 0 : i32
    %c0_i32_0 = arith.constant 0 : i32
    return %arg0, %c0_i32 : i32, i32
  }
}

</mosaic_0001>

<llo_original>
// kernel: tpu_custom_call.1
$region0: #{tpu_custom_call.1}
  #allocation0 [shape = 'u32[]', space=smem, size = 0x4, offset = 0x4, fixed_abs, tag = 'smem constant byte address 0x4 - core index']
  #allocation1 [shape = 'u32[144,128]{1,0:T(1,128)}', space=vmem, size = 0x12000, scoped, tag = 'internal scratch']
  %s0 = inlined_call_operand.vmem [shape: bf16[128,192], index: 0, kind: input, shape index: {}]
  %s1 = inlined_call_operand.hbm [shape: bf16[192,384], index: 1, kind: input, shape index: {}]
  %s2 = inlined_call_operand.vmem [shape: f32[1,384], index: 2, kind: input, shape index: {}]
  %s3 = inlined_call_operand.hbm [shape: bf16[384,896], index: 3, kind: input, shape index: {}]
  %s4 = inlined_call_operand.vmem [shape: f32[1,768], index: 4, kind: input, shape index: {}]
  %s5 = inlined_call_operand.hbm [shape: bf16[768,128], index: 5, kind: input, shape index: {}]
  %s6 = inlined_call_operand.vmem [shape: f32[1,128], index: 6, kind: input, shape index: {}]
  %s7 = inlined_call_operand.hbm [shape: bf16[128,384], index: 7, kind: output, shape index: {0}]
  %s8 = inlined_call_operand.hbm [shape: f32[128,128], index: 8, kind: output, shape index: {1}]
  %9 = xla_tuple %s7, %s8
  %s10 = sld [smem:[#allocation0]]
  $region81: #{tpu_custom_call.1} parent=0
    _
  %s12 = ssub.s32 1, %s10
  %s13 = scalar_select 0, %s12, %s10
  $region1: #{tpu_custom_call.1} parent=0
    #allocation2 [shape = 'u8[147456]{0}', space=vmem, size = 0x24000, scoped, tag = 'input window, operand 1, single buffered']
    #allocation3 [shape = 's32[2]{0}', space=sflag, size = 0x8, scoped, tag = 'scoped memory for tpu_custom_call.1']
    #allocation4 [shape = 's32[2]{0}', space=sflag, size = 0x8, scoped, tag = 'scoped memory for tpu_custom_call.1']
    #allocation5 [shape = 'u8[688128]{0}', space=vmem, size = 0xa8000, scoped, tag = 'input window, operand 3, single buffered']
    #allocation6 [shape = 's32[1]{0}', space=sflag, size = 0x4, scoped, tag = 'scoped memory for tpu_custom_call.1']
    #allocation7 [shape = 'u8[196608]{0}', space=vmem, size = 0x30000, scoped, tag = 'input window, operand 5, single buffered']
    #allocation8 [shape = 'u8[98304]{0}', space=vmem, size = 0x18000, scoped, tag = 'output window, operand 0']
    #allocation9 [shape = 'u8[65536]{0}', space=vmem, size = 0x10000, scoped, tag = 'output window, operand 1']
    #allocation10 [shape = 's32[2]{0}', space=sflag, size = 0x8, scoped, tag = 'scoped memory for tpu_custom_call.1']
    %14 = vsyncpa [#allocation3], 0
    %15 = vsyncpa [#allocation6], 0
    %16 = vsyncpa [#allocation4], 0
    %s17 = scalar_lea.sflag [#allocation4], 1
    %18 = vsyncpa %s17, 0
    %19 = vsyncpa [#allocation10], 0
    %s20 = scalar_lea.sflag [#allocation10], 1
    %21 = vsyncpa %s20, 0
    loop: start=0, step=1, limit=4
    $region2: #{tpu_custom_call.1} parent=1 // loop_pre_header
      _
    $region3: #{tpu_custom_call.1} parent=1 // loop_header
      %s23 = sphi 0, %s27
      %p24 = scmp.ge.s32.totalorder %s23, 4
      %s33 = sphi 0, %s35
      %s36 = sphi 0, %s33
      %s37 = sphi 0, %s36
      %s53 = sphi 0, %s37
      %s57 = sphi 0, %s57
      %s59 = sphi 0, %s57
      %s60 = sphi 0, %s59
      %s74 = sphi 0, %s60
      %s78 = sphi 0, %s78
      %s80 = sphi 0, %s78
      %s81 = sphi 0, %s80
      %s95 = sphi 0, %s81
      %s99 = sphi 0, %s99
      %s101 = sphi 0, %s99
      %s102 = sphi 0, %s101
      %s116 = sphi 0, %s102
      %s120 = sphi 0, %s120
      %s122 = sphi 0, %s120
      %s123 = sphi 0, %s122
      %s137 = sphi 0, %s123
      %s141 = sphi 0, %s141
      %s143 = sphi 0, %s141
      %s144 = sphi 0, %s143
      %s158 = sphi 0, %s144
      %s162 = sphi 0, %s162
      %s164 = sphi 0, %s162
      %s165 = sphi 0, %s164
      %s179 = sphi 0, %s165
      %s185 = sphi 0, %s187
      %s188 = sphi 0, %s185
      %s189 = sphi 0, %s188
      %s205 = sphi 0, %s189
      %s211 = sphi 0, %s213
      %s214 = sphi 0, %s211
      %s215 = sphi 0, %s214
      %s231 = sphi 0, %s215
    $region4: #{tpu_custom_call.1} parent=1 // loop_header_branch
      %26 = sbr.rel (%p24) target = $region8
    $region5: #{tpu_custom_call.1} parent=1 // loop_body
      %s28 = ssub.s32 %s23, 1
      %s29 = ssub.s32 %s23, 2
      %s30 = sadd.s32 %s23, 1
      %s31 = ssub.s32 %s23, %s30
      %p32 = scmp.eq.s32.totalorder %s31, 0
      %s34 = sadd.s32 %s33, 1
      %s35 = scalar_select %p32, %s33, %s34
      %p38 = pneg %p32
      %p39 = scmp.eq.s32.totalorder %s23, 1
      %p40 = por %p38, %p39
      %p41 = scmp.ne.s32.totalorder %s33, %s36
      %p42 = scmp.eq.s32.totalorder %s23, 0
      %p43 = por %p41, %p42
      %p44 = scmp.ne.s32.totalorder %s33, %s36
      %p45 = scmp.eq.s32.totalorder %s28, 1
      %p46 = por %p44, %p45
      %p47 = scmp.ne.s32.totalorder %s36, %s37
      %p48 = scmp.eq.s32.totalorder %s28, 0
      %p49 = por %p47, %p48
      %p50 = scmp.ne.s32.totalorder %s36, %s37
      %p51 = scmp.eq.s32.totalorder %s29, 1
      %p52 = por %p50, %p51
      %p54 = scmp.ne.s32.totalorder %s37, %s53
      %p55 = scmp.eq.s32.totalorder %s29, 0
      %p56 = por %p54, %p55
      %s58 = sadd.s32 %s57, 1
      %p61 = scmp.eq.s32.totalorder %s23, 1
      %p62 = scmp.ne.s32.totalorder %s57, %s59
      %p63 = scmp.eq.s32.totalorder %s23, 0
      %p64 = por %p62, %p63
      %p65 = scmp.ne.s32.totalorder %s57, %s59
      %p66 = scmp.eq.s32.totalorder %s28, 1
      %p67 = por %p65, %p66
      %p68 = scmp.ne.s32.totalorder %s59, %s60
      %p69 = scmp.eq.s32.totalorder %s28, 0
      %p70 = por %p68, %p69
      %p71 = scmp.ne.s32.totalorder %s59, %s60
      %p72 = scmp.eq.s32.totalorder %s29, 1
      %p73 = por %p71, %p72
      %p75 = scmp.ne.s32.totalorder %s60, %s74
      %p76 = scmp.eq.s32.totalorder %s29, 0
      %p77 = por %p75, %p76
      %s79 = sadd.s32 %s78, 1
      %p82 = scmp.eq.s32.totalorder %s23, 1
      %p83 = scmp.ne.s32.totalorder %s78, %s80
      %p84 = scmp.eq.s32.totalorder %s23, 0
      %p85 = por %p83, %p84
      %p86 = scmp.ne.s32.totalorder %s78, %s80
      %p87 = scmp.eq.s32.totalorder %s28, 1
      %p88 = por %p86, %p87
      %p89 = scmp.ne.s32.totalorder %s80, %s81
      %p90 = scmp.eq.s32.totalorder %s28, 0
      %p91 = por %p89, %p90
      %p92 = scmp.ne.s32.totalorder %s80, %s81
      %p93 = scmp.eq.s32.totalorder %s29, 1
      %p94 = por %p92, %p93
      %p96 = scmp.ne.s32.totalorder %s81, %s95
      %p97 = scmp.eq.s32.totalorder %s29, 0
      %p98 = por %p96, %p97
      %s100 = sadd.s32 %s99, 1
      %p103 = scmp.eq.s32.totalorder %s23, 1
      %p104 = scmp.ne.s32.totalorder %s99, %s101
      %p105 = scmp.eq.s32.totalorder %s23, 0
      %p106 = por %p104, %p105
      %p107 = scmp.ne.s32.totalorder %s99, %s101
      %p108 = scmp.eq.s32.totalorder %s28, 1
      %p109 = por %p107, %p108
      %p110 = scmp.ne.s32.totalorder %s101, %s102
      %p111 = scmp.eq.s32.totalorder %s28, 0
      %p112 = por %p110, %p111
      %p113 = scmp.ne.s32.totalorder %s101, %s102
      %p114 = scmp.eq.s32.totalorder %s29, 1
      %p115 = por %p113, %p114
      %p117 = scmp.ne.s32.totalorder %s102, %s116
      %p118 = scmp.eq.s32.totalorder %s29, 0
      %p119 = por %p117, %p118
      %s121 = sadd.s32 %s120, 1
      %p124 = scmp.eq.s32.totalorder %s23, 1
      %p125 = scmp.ne.s32.totalorder %s120, %s122
      %p126 = scmp.eq.s32.totalorder %s23, 0
      %p127 = por %p125, %p126
      %p128 = scmp.ne.s32.totalorder %s120, %s122
      %p129 = scmp.eq.s32.totalorder %s28, 1
      %p130 = por %p128, %p129
      %p131 = scmp.ne.s32.totalorder %s122, %s123
      %p132 = scmp.eq.s32.totalorder %s28, 0
      %p133 = por %p131, %p132
      %p134 = scmp.ne.s32.totalorder %s122, %s123
      %p135 = scmp.eq.s32.totalorder %s29, 1
      %p136 = por %p134, %p135
      %p138 = scmp.ne.s32.totalorder %s123, %s137
      %p139 = scmp.eq.s32.totalorder %s29, 0
      %p140 = por %p138, %p139
      %s142 = sadd.s32 %s141, 1
      %p145 = scmp.eq.s32.totalorder %s23, 1
      %p146 = scmp.ne.s32.totalorder %s141, %s143
      %p147 = scmp.eq.s32.totalorder %s23, 0
      %p148 = por %p146, %p147
      %p149 = scmp.ne.s32.totalorder %s141, %s143
      %p150 = scmp.eq.s32.totalorder %s28, 1
      %p151 = por %p149, %p150
      %p152 = scmp.ne.s32.totalorder %s143, %s144
      %p153 = scmp.eq.s32.totalorder %s28, 0
      %p154 = por %p152, %p153
      %p155 = scmp.ne.s32.totalorder %s143, %s144
      %p156 = scmp.eq.s32.totalorder %s29, 1
      %p157 = por %p155, %p156
      %p159 = scmp.ne.s32.totalorder %s144, %s158
      %p160 = scmp.eq.s32.totalorder %s29, 0
      %p161 = por %p159, %p160
      %s163 = sadd.s32 %s162, 1
      %p166 = scmp.eq.s32.totalorder %s23, 1
      %p167 = scmp.ne.s32.totalorder %s162, %s164
      %p168 = scmp.eq.s32.totalorder %s23, 0
      %p169 = por %p167, %p168
      %p170 = scmp.ne.s32.totalorder %s162, %s164
      %p171 = scmp.eq.s32.totalorder %s28, 1
      %p172 = por %p170, %p171
      %p173 = scmp.ne.s32.totalorder %s164, %s165
      %p174 = scmp.eq.s32.totalorder %s28, 0
      %p175 = por %p173, %p174
      %p176 = scmp.ne.s32.totalorder %s164, %s165
      %p177 = scmp.eq.s32.totalorder %s29, 1
      %p178 = por %p176, %p177
      %p180 = scmp.ne.s32.totalorder %s165, %s179
      %p181 = scmp.eq.s32.totalorder %s29, 0
      %p182 = por %p180, %p181
      %s183 = ssub.s32 %s23, %s30
      %p184 = scmp.eq.s32.totalorder %s183, 0
      %s186 = sadd.s32 %s185, 1
      %s187 = scalar_select %p184, %s185, %s186
      %p190 = pneg %p184
      %p191 = scmp.eq.s32.totalorder %s23, 1
      %p192 = por %p190, %p191
      %p193 = scmp.ne.s32.totalorder %s185, %s188
      %p194 = scmp.eq.s32.totalorder %s23, 0
      %p195 = por %p193, %p194
      %p196 = scmp.ne.s32.totalorder %s185, %s188
      %p197 = scmp.eq.s32.totalorder %s28, 1
      %p198 = por %p196, %p197
      %p199 = scmp.ne.s32.totalorder %s188, %s189
      %p200 = scmp.eq.s32.totalorder %s28, 0
      %p201 = por %p199, %p200
      %p202 = scmp.ne.s32.totalorder %s188, %s189
      %p203 = scmp.eq.s32.totalorder %s29, 1
      %p204 = por %p202, %p203
      %p206 = scmp.ne.s32.totalorder %s189, %s205
      %p207 = scmp.eq.s32.totalorder %s29, 0
      %p208 = por %p206, %p207
      %s209 = ssub.s32 %s23, %s30
      %p210 = scmp.eq.s32.totalorder %s209, 0
      %s212 = sadd.s32 %s211, 1
      %s213 = scalar_select %p210, %s211, %s212
      %p216 = pneg %p210
      %p217 = scmp.eq.s32.totalorder %s23, 1
      %p218 = por %p216, %p217
      %p219 = scmp.ne.s32.totalorder %s211, %s214
      %p220 = scmp.eq.s32.totalorder %s23, 0
      %p221 = por %p219, %p220
      %p222 = scmp.ne.s32.totalorder %s211, %s214
      %p223 = scmp.eq.s32.totalorder %s28, 1
      %p224 = por %p222, %p223
      %p225 = scmp.ne.s32.totalorder %s214, %s215
      %p226 = scmp.eq.s32.totalorder %s28, 0
      %p227 = por %p225, %p226
      %p228 = scmp.ne.s32.totalorder %s214, %s215
      %p229 = scmp.eq.s32.totalorder %s29, 1
      %p230 = por %p228, %p229
      %p232 = scmp.ne.s32.totalorder %s215, %s231
      %p233 = scmp.eq.s32.totalorder %s29, 0
      %p234 = por %p232, %p233
      %p235 = scmp.le.s32.totalorder 1, %s23
      %p236 = scmp.lt.s32.totalorder %s23, 3
      %p237 = pnand %p235, %p236
      %p238 = pneg %p237
      // Predicated region
      $region9: #{tpu_custom_call.1} parent=5 // pred_check
        _
      $region10: #{tpu_custom_call.1} parent=5 // pred_check_branch
        %240 = sbr.rel (%p237) target = $region12
      $region11: #{tpu_custom_call.1} parent=5 // pred_region
        %s241 = ssub.s32 %s23, 1
        // Predicated region
        $region13: #{tpu_custom_call.1} parent=11 // pred_check
          %p242 = pneg %p70
        $region14: #{tpu_custom_call.1} parent=11 // pred_check_branch
          %244 = sbr.rel (%p242) target = $region16
        $region15: #{tpu_custom_call.1} parent=11 // pred_region
          %s246 = ssub.s32 4608, 4608
          %247 = vsyncadd [#allocation3], %s246
          %s248 = sshll.u32 [#allocation2], 4
          %s249 = int_to_ptr.vmem [resolvable:$true] %s248
          %254 = dma.hbm_to_vmem [thread:$0]  %s1, 4608, %s249, [#allocation3], 192, 192, 12
        $region16: #{tpu_custom_call.1} parent=11 // pred_fallthru
          _
        // Predicated region
        $region17: #{tpu_custom_call.1} parent=11 // pred_check
          %p255 = pneg %p91
        $region18: #{tpu_custom_call.1} parent=11 // pred_check_branch
          %257 = sbr.rel (%p255) target = $region20
        $region19: #{tpu_custom_call.1} parent=11 // pred_region
          _
        $region20: #{tpu_custom_call.1} parent=11 // pred_fallthru
          _
        // Predicated region
        $region21: #{tpu_custom_call.1} parent=11 // pred_check
          %p258 = pneg %p112
        $region22: #{tpu_custom_call.1} parent=11 // pred_check_branch
          %260 = sbr.rel (%p258) target = $region24
        $region23: #{tpu_custom_call.1} parent=11 // pred_region
          %s262 = ssub.s32 21504, 21504
          %263 = vsyncadd [#allocation6], %s262
          %s264 = sshll.u32 [#allocation5], 4
          %s265 = int_to_ptr.vmem [resolvable:$true] %s264
          %270 = dma.hbm_to_vmem [thread:$0]  %s3, 21504, %s265, [#allocation6], 448, 448, 28
        $region24: #{tpu_custom_call.1} parent=11 // pred_fallthru
          _
        // Predicated region
        $region25: #{tpu_custom_call.1} parent=11 // pred_check
          %p271 = pneg %p133
        $region26: #{tpu_custom_call.1} parent=11 // pred_check_branch
          %273 = sbr.rel (%p271) target = $region28
        $region27: #{tpu_custom_call.1} parent=11 // pred_region
          _
        $region28: #{tpu_custom_call.1} parent=11 // pred_fallthru
          _
        // Predicated region
        $region29: #{tpu_custom_call.1} parent=11 // pred_check
          %p274 = pneg %p154
        $region30: #{tpu_custom_call.1} parent=11 // pred_check_branch
          %276 = sbr.rel (%p274) target = $region32
        $region31: #{tpu_custom_call.1} parent=11 // pred_region
          %s278 = ssub.s32 6144, 6144
          %279 = vsyncadd [#allocation6], %s278
          %s280 = sshll.u32 [#allocation7], 4
          %s281 = int_to_ptr.vmem [resolvable:$true] %s280
          %286 = dma.hbm_to_vmem [thread:$0]  %s5, 6144, %s281, [#allocation6], 64, 64, 4
        $region32: #{tpu_custom_call.1} parent=11 // pred_fallthru
          _
        // Predicated region
        $region33: #{tpu_custom_call.1} parent=11 // pred_check
          %p287 = pneg %p175
        $region34: #{tpu_custom_call.1} parent=11 // pred_check_branch
          %289 = sbr.rel (%p287) target = $region36
        $region35: #{tpu_custom_call.1} parent=11 // pred_region
          _
        $region36: #{tpu_custom_call.1} parent=11 // pred_fallthru
          _
      $region12: #{tpu_custom_call.1} parent=5 // pred_fallthru
        _
      %p290 = scmp.lt.s32.totalorder %s23, 2
      // Predicated region
      $region37: #{tpu_custom_call.1} parent=5 // pred_check
        %p291 = pneg %p290
      $region38: #{tpu_custom_call.1} parent=5 // pred_check_branch
        %293 = sbr.rel (%p291) target = $region40
      $region39: #{tpu_custom_call.1} parent=5 // pred_region
        // Predicated region
        $region41: #{tpu_custom_call.1} parent=39 // pred_check
          %p294 = pneg %p43
        $region42: #{tpu_custom_call.1} parent=39 // pred_check_branch
          %296 = sbr.rel (%p294) target = $region44
        $region43: #{tpu_custom_call.1} parent=39 // pred_region
          %s297 = smul.u32 8, %s23
          %p298 = scmp.lt.s32.totalorder %s297, 15
          %s299 = scalar_select %p298, %s297, 15
          %s300 = smul.addr %s299, 2
          %s301 = smul.addr %s300, 4
          %s302 = scalar_lea.vmem %s0, %s301
          %s303 = smul.u32 8, %s23
        $region44: #{tpu_custom_call.1} parent=39 // pred_fallthru
          _
      $region40: #{tpu_custom_call.1} parent=5 // pred_fallthru
        _
      %p304 = scmp.le.s32.totalorder 1, %s23
      %p305 = scmp.lt.s32.totalorder %s23, 3
      %p306 = pnand %p304, %p305
      %p307 = pneg %p306
      // Predicated region
      $region45: #{tpu_custom_call.1} parent=5 // pred_check
        _
      $region46: #{tpu_custom_call.1} parent=5 // pred_check_branch
        %309 = sbr.rel (%p306) target = $region48
      $region47: #{tpu_custom_call.1} parent=5 // pred_region
        %s310 = ssub.s32 %s23, 1
        // Predicated region
        $region49: #{tpu_custom_call.1} parent=47 // pred_check
          %p311 = pneg %p70
        $region50: #{tpu_custom_call.1} parent=47 // pred_check_branch
          %313 = sbr.rel (%p311) target = $region52
        $region51: #{tpu_custom_call.1} parent=47 // pred_region
          %314 = dma.done [#allocation3], 4608
        $region52: #{tpu_custom_call.1} parent=47 // pred_fallthru
          _
        // Predicated region
        $region53: #{tpu_custom_call.1} parent=47 // pred_check
          %p315 = pneg %p112
        $region54: #{tpu_custom_call.1} parent=47 // pred_check_branch
          %317 = sbr.rel (%p315) target = $region56
        $region55: #{tpu_custom_call.1} parent=47 // pred_region
          %318 = dma.done [#allocation6], 21504
        $region56: #{tpu_custom_call.1} parent=47 // pred_fallthru
          _
        // Predicated region
        $region57: #{tpu_custom_call.1} parent=47 // pred_check
          %p319 = pneg %p154
        $region58: #{tpu_custom_call.1} parent=47 // pred_check_branch
          %321 = sbr.rel (%p319) target = $region60
        $region59: #{tpu_custom_call.1} parent=47 // pred_region
          %322 = dma.done [#allocation6], 6144
        $region60: #{tpu_custom_call.1} parent=47 // pred_fallthru
          _
        %s323 = smul.u32 8, %s28
        %p324 = scmp.lt.s32.totalorder %s323, 15
        %s325 = scalar_select %p324, %s323, 15
        %s326 = smul.addr %s325, 2
        %s327 = smul.addr %s326, 4
        %s328 = scalar_lea.vmem %s0, %s327
        %p329 = pneg %p49
        %p330 = pneg %p46
        %p331 = pneg %p70
        %p332 = pneg %p67
        %p333 = pneg %p91
        %p334 = pneg %p88
        %p335 = pneg %p112
        %p336 = pneg %p109
        %p337 = pneg %p133
        %p338 = pneg %p130
        %p339 = pneg %p154
        %p340 = pneg %p151
        %p341 = pneg %p175
        %p342 = pneg %p172
        %p343 = pneg %p201
        %p344 = pneg %p198
        %s345 = sand.u32 %s188, 1
        %s346 = scalar_lea.sflag [#allocation4], %s345
        %s347 = sand.u32 %s188, 1
        %s348 = smul.addr %s347, 96
        %s349 = scalar_lea.vmem [#allocation8], %s348
        %p350 = pneg %p227
        %p351 = pneg %p224
        %s352 = sand.u32 %s214, 1
        %s353 = scalar_lea.sflag [#allocation10], %s352
        %s354 = sand.u32 %s214, 1
        %s355 = smul.addr %s354, 64
        %s356 = scalar_lea.vmem [#allocation9], %s355
        %s357 = smul.u32 8, %s28
        %p358 = scmp.lt.s32.totalorder %s357, 15
        %s359 = scalar_select %p358, %s357, 15
        %s360 = smul.addr %s359, 2
        %s361 = smul.addr %s360, 4
        %s362 = scalar_lea.vmem %s0, %s361
        %s363 = smul.u32 8, %s28
        %s364 = smul.u32 8, %s28
        %s365 = smul.u32 8, %s28
        %v367 = vld [vmem:[%s362] sm:$0xff]
        %v368 = vld [vmem:[%s362 + $0x8] sm:$0xff]
        %v369 = vld [vmem:[%s362 + $0x10] sm:$0xff]
        %v370 = vld [vmem:[%s362 + $0x18] sm:$0xff]
        %v371 = vld [vmem:[%s362 + $0x20] sm:$0xff]
        %v372 = vld [vmem:[%s362 + $0x28] sm:$0xff]
        %v373 = vld [vmem:[%s362 + $0x30] sm:$0xff]
        %v374 = vld [vmem:[%s362 + $0x38] sm:$0xff]
        %v375 = vld [vmem:[#allocation2] sm:$0xff]
        %v376 = vld [vmem:[#allocation2 + $0x8] sm:$0xf]
        %v377 = vld [vmem:[#allocation2 + $0xc] sm:$0xff]
        %v378 = vld [vmem:[#allocation2 + $0x14] sm:$0xf]
        %v379 = vld [vmem:[#allocation2 + $0x18] sm:$0xff]
        %v380 = vld [vmem:[#allocation2 + $0x20] sm:$0xf]
        %v381 = vld [vmem:[#allocation2 + $0x24] sm:$0xff]
        %v382 = vld [vmem:[#allocation2 + $0x2c] sm:$0xf]
        %v383 = vld [vmem:[#allocation2 + $0x30] sm:$0xff]
        %v384 = vld [vmem:[#allocation2 + $0x38] sm:$0xf]
        %v385 = vld [vmem:[#allocation2 + $0x3c] sm:$0xff]
        %v386 = vld [vmem:[#allocation2 + $0x44] sm:$0xf]
        %v387 = vld [vmem:[#allocation2 + $0x48] sm:$0xff]
        %v388 = vld [vmem:[#allocation2 + $0x50] sm:$0xf]
        %v389 = vld [vmem:[#allocation2 + $0x54] sm:$0xff]
        %v390 = vld [vmem:[#allocation2 + $0x5c] sm:$0xf]
        %v391 = vld [vmem:[#allocation2 + $0x60] sm:$0xff]
        %v392 = vld [vmem:[#allocation2 + $0x68] sm:$0xf]
        %v393 = vld [vmem:[#allocation2 + $0x6c] sm:$0xff]
        %v394 = vld [vmem:[#allocation2 + $0x74] sm:$0xf]
        %v395 = vld [vmem:[#allocation2 + $0x78] sm:$0xff]
        %v396 = vld [vmem:[#allocation2 + $0x80] sm:$0xf]
        %v397 = vld [vmem:[#allocation2 + $0x84] sm:$0xff]
        %v398 = vld [vmem:[#allocation2 + $0x8c] sm:$0xf]
        %v399 = vld [vmem:[#allocation2 + $0x90] sm:$0xff]
        %v400 = vld [vmem:[#allocation2 + $0x98] sm:$0xf]
        %v401 = vld [vmem:[#allocation2 + $0x9c] sm:$0xff]
        %v402 = vld [vmem:[#allocation2 + $0xa4] sm:$0xf]
        %v403 = vld [vmem:[#allocation2 + $0xa8] sm:$0xff]
        %v404 = vld [vmem:[#allocation2 + $0xb0] sm:$0xf]
        %v405 = vld [vmem:[#allocation2 + $0xb4] sm:$0xff]
        %v406 = vld [vmem:[#allocation2 + $0xbc] sm:$0xf]
        %v407 = vld [vmem:[#allocation2 + $0xc0] sm:$0xff]
        %v408 = vld [vmem:[#allocation2 + $0xc8] sm:$0xf]
        %v409 = vld [vmem:[#allocation2 + $0xcc] sm:$0xff]
        %v410 = vld [vmem:[#allocation2 + $0xd4] sm:$0xf]
        %v411 = vld [vmem:[#allocation2 + $0xd8] sm:$0xff]
        %v412 = vld [vmem:[#allocation2 + $0xe0] sm:$0xf]
        %v413 = vld [vmem:[#allocation2 + $0xe4] sm:$0xff]
        %v414 = vld [vmem:[#allocation2 + $0xec] sm:$0xf]
        %v415 = vld [vmem:[#allocation2 + $0xf0] sm:$0xff]
        %v416 = vld [vmem:[#allocation2 + $0xf8] sm:$0xf]
        %v417 = vld [vmem:[#allocation2 + $0xfc] sm:$0xff]
        %v418 = vld [vmem:[#allocation2 + $0x104] sm:$0xf]
        %v419 = vld [vmem:[#allocation2 + $0x108] sm:$0xff]
        %v420 = vld [vmem:[#allocation2 + $0x110] sm:$0xf]
        %v421 = vld [vmem:[#allocation2 + $0x114] sm:$0xff]
        %v422 = vld [vmem:[#allocation2 + $0x11c] sm:$0xf]
        %v423 = vld [vmem:[%s2] sm:$0x7]
        %v425 = vlaneseq
        %v426 = vshrl.u32 %v425, 7
        %v427 = vsub.s32 0, %v426
        %v428 = vrot.slane %v423, %v427
        %v429 = vlaneseq
        %v430 = vshrl.u32 %v429, 7
        %v431 = vsub.s32 1, %v430
        %v432 = vrot.slane %v423, %v431
        %v433 = vlaneseq
        %v434 = vshrl.u32 %v433, 7
        %v435 = vsub.s32 2, %v434
        %v436 = vrot.slane %v423, %v435
        %v448 = vunpack.c.l.b16 %v367
        %v449 = vunpack.c.h.b16 %v367
        %v450 = vunpack.c.l.b16 %v368
        %v451 = vunpack.c.h.b16 %v368
        %v452 = vunpack.c.l.b16 %v369
        %v453 = vunpack.c.h.b16 %v369
        %v454 = vunpack.c.l.b16 %v370
        %v455 = vunpack.c.h.b16 %v370
        %v456 = vunpack.c.l.b16 %v371
        %v457 = vunpack.c.h.b16 %v371
        %v458 = vunpack.c.l.b16 %v372
        %v459 = vunpack.c.h.b16 %v372
        %v460 = vunpack.c.l.b16 %v373
        %v461 = vunpack.c.h.b16 %v373
        %v462 = vunpack.c.l.b16 %v374
        %v463 = vunpack.c.h.b16 %v374
        %v464 = vpack.c.b16 %v450, %v448
        %v465 = vpack.c.b16 %v451, %v449
        %v466 = vpack.c.b16 %v454, %v452
        %v467 = vpack.c.b16 %v455, %v453
        %v468 = vpack.c.b16 %v458, %v456
        %v469 = vpack.c.b16 %v459, %v457
        %v470 = vpack.c.b16 %v462, %v460
        %v471 = vpack.c.b16 %v463, %v461
        %v524 = vunpack.c.l.b16 %v375
        %v525 = vunpack.c.h.b16 %v375
        %v526 = vunpack.c.l.b16 %v376
        %v527 = vunpack.c.l.b16 %v377
        %v528 = vunpack.c.h.b16 %v377
        %v529 = vunpack.c.l.b16 %v378
        %v530 = vunpack.c.l.b16 %v379
        %v531 = vunpack.c.h.b16 %v379
        %v532 = vunpack.c.l.b16 %v380
        %v533 = vunpack.c.l.b16 %v381
        %v534 = vunpack.c.h.b16 %v381
        %v535 = vunpack.c.l.b16 %v382
        %v536 = vunpack.c.l.b16 %v383
        %v537 = vunpack.c.h.b16 %v383
        %v538 = vunpack.c.l.b16 %v384
        %v539 = vunpack.c.l.b16 %v385
        %v540 = vunpack.c.h.b16 %v385
        %v541 = vunpack.c.l.b16 %v386
        %v542 = vunpack.c.l.b16 %v387
        %v543 = vunpack.c.h.b16 %v387
        %v544 = vunpack.c.l.b16 %v388
        %v545 = vunpack.c.l.b16 %v389
        %v546 = vunpack.c.h.b16 %v389
        %v547 = vunpack.c.l.b16 %v390
        %v548 = vunpack.c.l.b16 %v391
        %v549 = vunpack.c.h.b16 %v391
        %v550 = vunpack.c.l.b16 %v392
        %v551 = vunpack.c.l.b16 %v393
        %v552 = vunpack.c.h.b16 %v393
        %v553 = vunpack.c.l.b16 %v394
        %v554 = vunpack.c.l.b16 %v395
        %v555 = vunpack.c.h.b16 %v395
        %v556 = vunpack.c.l.b16 %v396
        %v557 = vunpack.c.l.b16 %v397
        %v558 = vunpack.c.h.b16 %v397
        %v559 = vunpack.c.l.b16 %v398
        %v560 = vunpack.c.l.b16 %v399
        %v561 = vunpack.c.h.b16 %v399
        %v562 = vunpack.c.l.b16 %v400
        %v563 = vunpack.c.l.b16 %v401
        %v564 = vunpack.c.h.b16 %v401
        %v565 = vunpack.c.l.b16 %v402
        %v566 = vunpack.c.l.b16 %v403
        %v567 = vunpack.c.h.b16 %v403
        %v568 = vunpack.c.l.b16 %v404
        %v569 = vunpack.c.l.b16 %v405
        %v570 = vunpack.c.h.b16 %v405
        %v571 = vunpack.c.l.b16 %v406
        %v572 = vunpack.c.l.b16 %v407
        %v573 = vunpack.c.h.b16 %v407
        %v574 = vunpack.c.l.b16 %v408
        %v575 = vunpack.c.l.b16 %v409
        %v576 = vunpack.c.h.b16 %v409
        %v577 = vunpack.c.l.b16 %v410
        %v578 = vunpack.c.l.b16 %v411
        %v579 = vunpack.c.h.b16 %v411
        %v580 = vunpack.c.l.b16 %v412
        %v581 = vunpack.c.l.b16 %v413
        %v582 = vunpack.c.h.b16 %v413
        %v583 = vunpack.c.l.b16 %v414
        %v584 = vunpack.c.l.b16 %v415
        %v585 = vunpack.c.h.b16 %v415
        %v586 = vunpack.c.l.b16 %v416
        %v587 = vunpack.c.l.b16 %v417
        %v588 = vunpack.c.h.b16 %v417
        %v589 = vunpack.c.l.b16 %v418
        %v590 = vunpack.c.l.b16 %v419
        %v591 = vunpack.c.h.b16 %v419
        %v592 = vunpack.c.l.b16 %v420
        %v593 = vunpack.c.l.b16 %v421
        %v594 = vunpack.c.h.b16 %v421
        %v595 = vunpack.c.l.b16 %v422
        %v596 = vpack.c.b16 %v527, %v524
        %v597 = vpack.c.b16 %v528, %v525
        %v598 = vpack.c.b16 %v529, %v526
        %v599 = vpack.c.b16 %v533, %v530
        %v600 = vpack.c.b16 %v534, %v531
        %v601 = vpack.c.b16 %v535, %v532
        %v602 = vpack.c.b16 %v539, %v536
        %v603 = vpack.c.b16 %v540, %v537
        %v604 = vpack.c.b16 %v541, %v538
        %v605 = vpack.c.b16 %v545, %v542
        %v606 = vpack.c.b16 %v546, %v543
        %v607 = vpack.c.b16 %v547, %v544
        %v608 = vpack.c.b16 %v551, %v548
        %v609 = vpack.c.b16 %v552, %v549
        %v610 = vpack.c.b16 %v553, %v550
        %v611 = vpack.c.b16 %v557, %v554
        %v612 = vpack.c.b16 %v558, %v555
        %v613 = vpack.c.b16 %v559, %v556
        %v614 = vpack.c.b16 %v563, %v560
        %v615 = vpack.c.b16 %v564, %v561
        %v616 = vpack.c.b16 %v565, %v562
        %v617 = vpack.c.b16 %v569, %v566
        %v618 = vpack.c.b16 %v570, %v567
        %v619 = vpack.c.b16 %v571, %v568
        %v620 = vpack.c.b16 %v575, %v572
        %v621 = vpack.c.b16 %v576, %v573
        %v622 = vpack.c.b16 %v577, %v574
        %v623 = vpack.c.b16 %v581, %v578
        %v624 = vpack.c.b16 %v582, %v579
        %v625 = vpack.c.b16 %v583, %v580
        %v626 = vpack.c.b16 %v587, %v584
        %v627 = vpack.c.b16 %v588, %v585
        %v628 = vpack.c.b16 %v589, %v586
        %v629 = vpack.c.b16 %v593, %v590
        %v630 = vpack.c.b16 %v594, %v591
        %v631 = vpack.c.b16 %v595, %v592
        %vm668 = vcmask 523264
        %v670 = vsel %vm668, %v465, 0
        %v673 = vsel %vm668, %v467, 0
        %v676 = vsel %vm668, %v469, 0
        %v679 = vsel %vm668, %v471, 0
        %681 = vmatprep.subr.bf16.mxu0 %v597
        %682 = vmatpush1.bf16.msra.mxu0 %v596
        %683 = vmatprep.subr.bf16.mxu0 %v600
        %684 = vmatpush1.bf16.msra.mxu0 %v599
        %685 = vmatprep.subr.bf16.mxu0 %v603
        %686 = vmatpush1.bf16.msra.mxu0 %v602
        %687 = vmatprep.subr.bf16.mxu0 %v606
        %688 = vmatpush1.bf16.msra.mxu0 %v605
        %689 = vmatprep.subr.bf16.mxu0 %v609
        %690 = vmatpush1.bf16.msra.mxu0 %v608
        %691 = vmatprep.subr.bf16.mxu0 %v612
        %692 = vmatpush1.bf16.msra.mxu0 %v611
        %693 = vmatprep.subr.bf16.mxu0 %v615
        %694 = vmatpush1.bf16.msra.mxu0 %v614
        %695 = vmatprep.subr.bf16.mxu0 %v618
        %696 = vmatpush1.bf16.msra.mxu0 %v617
        %697 = vmatprep.subr.bf16.mxu0 %v621
        %698 = vmatpush1.bf16.msra.mxu0 %v620
        %699 = vmatprep.subr.bf16.mxu0 %v624
        %700 = vmatpush1.bf16.msra.mxu0 %v623
        %701 = vmatprep.subr.bf16.mxu0 %v627
        %702 = vmatpush1.bf16.msra.mxu0 %v626
        %703 = vmatprep.subr.bf16.mxu0 %v630
        %704 = vmatpush1.bf16.msra.mxu0 %v629
        %705 = vmatprep.subr.bf16.mxu0 0
        %706 = vmatpush1.bf16.msra.mxu0 0
        %707 = vmatprep.subr.bf16.mxu0 0
        %708 = vmatpush1.bf16.msra.mxu0 0
        %709 = vmatprep.subr.bf16.mxu0 0
        %710 = vmatpush1.bf16.msra.mxu0 0
        %711 = vmatprep.subr.bf16.mxu0 0
        %712 = vmatpush1.bf16.msra.mxu0 0
        %713 = vmatprep.mubr.bf16.mxu0 %v670
        %714 = vmatmul.mubr.bf16.gmra.mrb[0].mxu0 %v464
        %v715 = vpop.f32.mrb[0].mxu0
        %v716 = vadd.f32 %v428, %v715
        %v717 = vpop.f32.mrb[0].mxu0
        %v718 = vadd.f32 %v432, %v717
        %v719 = vpop.f32.mrb[0].mxu0
        %v720 = vadd.f32 %v428, %v719
        %v721 = vpop.f32.mrb[0].mxu0
        %v722 = vadd.f32 %v432, %v721
        %723 = vmatprep.mubr.bf16.mxu0 %v673
        %724 = vmatmul.mubr.bf16.gmra.mrb[0].mxu0 %v466
        %v725 = vpop.f32.mrb[0].mxu0
        %v726 = vadd.f32 %v428, %v725
        %v727 = vpop.f32.mrb[0].mxu0
        %v728 = vadd.f32 %v432, %v727
        %v729 = vpop.f32.mrb[0].mxu0
        %v730 = vadd.f32 %v428, %v729
        %v731 = vpop.f32.mrb[0].mxu0
        %v732 = vadd.f32 %v432, %v731
        %733 = vmatprep.mubr.bf16.mxu0 %v676
        %734 = vmatmul.mubr.bf16.gmra.mrb[0].mxu0 %v468
        %v735 = vpop.f32.mrb[0].mxu0
        %v736 = vadd.f32 %v428, %v735
        %v737 = vpop.f32.mrb[0].mxu0
        %v738 = vadd.f32 %v432, %v737
        %v739 = vpop.f32.mrb[0].mxu0
        %v740 = vadd.f32 %v428, %v739
        %v741 = vpop.f32.mrb[0].mxu0
        %v742 = vadd.f32 %v432, %v741
        %743 = vmatprep.mubr.bf16.mxu0 %v679
        %744 = vmatmul.mubr.bf16.gmra.mrb[0].mxu0 %v470
        %v745 = vpop.f32.mrb[0].mxu0
        %v746 = vadd.f32 %v428, %v745
        %v747 = vpop.f32.mrb[0].mxu0
        %v748 = vadd.f32 %v432, %v747
        %v749 = vpop.f32.mrb[0].mxu0
        %v750 = vadd.f32 %v428, %v749
        %v751 = vpop.f32.mrb[0].mxu0
        %v752 = vadd.f32 %v432, %v751
        %753 = vdwg.mxu0
        %754 = vmatprep.subr.bf16.mxu0 0
        %755 = vmatpush1.bf16.msra.mxu0 %v598
        %756 = vmatprep.subr.bf16.mxu0 0
        %757 = vmatpush1.bf16.msra.mxu0 %v601
        %758 = vmatprep.subr.bf16.mxu0 0
        %759 = vmatpush1.bf16.msra.mxu0 %v604
        %760 = vmatprep.subr.bf16.mxu0 0
        %761 = vmatpush1.bf16.msra.mxu0 %v607
        %762 = vmatprep.subr.bf16.mxu0 0
        %763 = vmatpush1.bf16.msra.mxu0 %v610
        %764 = vmatprep.subr.bf16.mxu0 0
        %765 = vmatpush1.bf16.msra.mxu0 %v613
        %766 = vmatprep.subr.bf16.mxu0 0
        %767 = vmatpush1.bf16.msra.mxu0 %v616
        %768 = vmatprep.subr.bf16.mxu0 0
        %769 = vmatpush1.bf16.msra.mxu0 %v619
        %770 = vmatprep.subr.bf16.mxu0 0
        %771 = vmatpush1.bf16.msra.mxu0 %v622
        %772 = vmatprep.subr.bf16.mxu0 0
        %773 = vmatpush1.bf16.msra.mxu0 %v625
        %774 = vmatprep.subr.bf16.mxu0 0
        %775 = vmatpush1.bf16.msra.mxu0 %v628
        %776 = vmatprep.subr.bf16.mxu0 0
        %777 = vmatpush1.bf16.msra.mxu0 %v631
        %778 = vmatprep.subr.bf16.mxu0 0
        %779 = vmatpush1.bf16.msra.mxu0 0
        %780 = vmatprep.subr.bf16.mxu0 0
        %781 = vmatpush1.bf16.msra.mxu0 0
        %782 = vmatprep.subr.bf16.mxu0 0
        %783 = vmatpush1.bf16.msra.mxu0 0
        %784 = vmatprep.subr.bf16.mxu0 0
        %785 = vmatpush1.bf16.msra.mxu0 0
        %786 = vmatprep.mubr.bf16.mxu0 %v670
        %787 = vmatmul.mubr.bf16.gmra.mrb[0].mxu0 %v464
        %v788 = vpop.f32.mrb[0].mxu0
        %v789 = vadd.f32 %v436, %v788
        %v790 = vpop.f32.mrb[0].mxu0
        %v791 = vpop.f32.mrb[0].mxu0
        %v792 = vadd.f32 %v436, %v791
        %v793 = vpop.f32.mrb[0].mxu0
        %794 = vmatprep.mubr.bf16.mxu0 %v673
        %795 = vmatmul.mubr.bf16.gmra.mrb[0].mxu0 %v466
        %v796 = vpop.f32.mrb[0].mxu0
        %v797 = vadd.f32 %v436, %v796
        %v798 = vpop.f32.mrb[0].mxu0
        %v799 = vpop.f32.mrb[0].mxu0
        %v800 = vadd.f32 %v436, %v799
        %v801 = vpop.f32.mrb[0].mxu0
        %802 = vmatprep.mubr.bf16.mxu0 %v676
        %803 = vmatmul.mubr.bf16.gmra.mrb[0].mxu0 %v468
        %v804 = vpop.f32.mrb[0].mxu0
        %v805 = vadd.f32 %v436, %v804
        %v806 = vpop.f32.mrb[0].mxu0
        %v807 = vpop.f32.mrb[0].mxu0
        %v808 = vadd.f32 %v436, %v807
        %v809 = vpop.f32.mrb[0].mxu0
        %810 = vmatprep.mubr.bf16.mxu0 %v679
        %811 = vmatmul.mubr.bf16.gmra.mrb[0].mxu0 %v470
        %v812 = vpop.f32.mrb[0].mxu0
        %v813 = vadd.f32 %v436, %v812
        %v814 = vpop.f32.mrb[0].mxu0
        %v815 = vpop.f32.mrb[0].mxu0
        %v816 = vadd.f32 %v436, %v815
        %v817 = vpop.f32.mrb[0].mxu0
        %818 = vdwg.mxu0
        %v819 = vpack.c.bf16 %v720, %v716
        %v820 = vpack.c.bf16 %v722, %v718
        %v821 = vpack.c.bf16 %v792, %v789
        %v822 = vpack.c.bf16 %v730, %v726
        %v823 = vpack.c.bf16 %v732, %v728
        %v824 = vpack.c.bf16 %v800, %v797
        %v825 = vpack.c.bf16 %v740, %v736
        %v826 = vpack.c.bf16 %v742, %v738
        %v827 = vpack.c.bf16 %v808, %v805
        %v828 = vpack.c.bf16 %v750, %v746
        %v829 = vpack.c.bf16 %v752, %v748
        %v830 = vpack.c.bf16 %v816, %v813
        %v843 = vunpack.c.l.b16 %v819
        %v844 = vunpack.c.l.b16 %v820
        %v845 = vunpack.c.l.b16 %v821
        %v846 = vunpack.c.h.b16 %v819
        %v847 = vunpack.c.h.b16 %v820
        %v848 = vunpack.c.h.b16 %v821
        %v849 = vunpack.c.l.b16 %v822
        %v850 = vunpack.c.l.b16 %v823
        %v851 = vunpack.c.l.b16 %v824
        %v852 = vunpack.c.h.b16 %v822
        %v853 = vunpack.c.h.b16 %v823
        %v854 = vunpack.c.h.b16 %v824
        %v855 = vunpack.c.l.b16 %v825
        %v856 = vunpack.c.l.b16 %v826
        %v857 = vunpack.c.l.b16 %v827
        %v858 = vunpack.c.h.b16 %v825
        %v859 = vunpack.c.h.b16 %v826
        %v860 = vunpack.c.h.b16 %v827
        %v861 = vunpack.c.l.b16 %v828
        %v862 = vunpack.c.l.b16 %v829
        %v863 = vunpack.c.l.b16 %v830
        %v864 = vunpack.c.h.b16 %v828
        %v865 = vunpack.c.h.b16 %v829
        %v866 = vunpack.c.h.b16 %v830
        %v867 = vpack.c.b16 %v844, %v843
        %v868 = vpack.c.b16 %v845, %v845
        %v869 = vpack.c.b16 %v847, %v846
        %v870 = vpack.c.b16 %v848, %v848
        %v871 = vpack.c.b16 %v850, %v849
        %v872 = vpack.c.b16 %v851, %v851
        %v873 = vpack.c.b16 %v853, %v852
        %v874 = vpack.c.b16 %v854, %v854
        %v875 = vpack.c.b16 %v856, %v855
        %v876 = vpack.c.b16 %v857, %v857
        %v877 = vpack.c.b16 %v859, %v858
        %v878 = vpack.c.b16 %v860, %v860
        %v879 = vpack.c.b16 %v862, %v861
        %v880 = vpack.c.b16 %v863, %v863
        %v881 = vpack.c.b16 %v865, %v864
        %v882 = vpack.c.b16 %v866, %v866
        %899 = vst [vmem:[%s349] sm:$0xff] %v867
        %900 = vst [vmem:[%s349 + $0x8] sm:$0xf] %v868
        %901 = vst [vmem:[%s349 + $0xc] sm:$0xff] %v869
        %902 = vst [vmem:[%s349 + $0x14] sm:$0xf] %v870
        %903 = vst [vmem:[%s349 + $0x18] sm:$0xff] %v871
        %904 = vst [vmem:[%s349 + $0x20] sm:$0xf] %v872
        %905 = vst [vmem:[%s349 + $0x24] sm:$0xff] %v873
        %906 = vst [vmem:[%s349 + $0x2c] sm:$0xf] %v874
        %907 = vst [vmem:[%s349 + $0x30] sm:$0xff] %v875
        %908 = vst [vmem:[%s349 + $0x38] sm:$0xf] %v876
        %909 = vst [vmem:[%s349 + $0x3c] sm:$0xff] %v877
        %910 = vst [vmem:[%s349 + $0x44] sm:$0xf] %v878
        %911 = vst [vmem:[%s349 + $0x48] sm:$0xff] %v879
        %912 = vst [vmem:[%s349 + $0x50] sm:$0xf] %v880
        %913 = vst [vmem:[%s349 + $0x54] sm:$0xff] %v881
        %914 = vst [vmem:[%s349 + $0x5c] sm:$0xf] %v882
        %v915 = vld [vmem:[#allocation5] sm:$0xff]
        %v916 = vld [vmem:[#allocation5 + $0x8] sm:$0xff]
        %v917 = vld [vmem:[#allocation5 + $0x10] sm:$0xff]
        %v918 = vld [vmem:[#allocation5 + $0x18] sm:$0xf]
        %v919 = vld [vmem:[#allocation5 + $0x1c] sm:$0xff]
        %v920 = vld [vmem:[#allocation5 + $0x24] sm:$0xff]
        %v921 = vld [vmem:[#allocation5 + $0x2c] sm:$0xff]
        %v922 = vld [vmem:[#allocation5 + $0x34] sm:$0xf]
        %v923 = vld [vmem:[#allocation5 + $0x38] sm:$0xff]
        %v924 = vld [vmem:[#allocation5 + $0x40] sm:$0xff]
        %v925 = vld [vmem:[#allocation5 + $0x48] sm:$0xff]
        %v926 = vld [vmem:[#allocation5 + $0x50] sm:$0xf]
        %v927 = vld [vmem:[#allocation5 + $0x54] sm:$0xff]
        %v928 = vld [vmem:[#allocation5 + $0x5c] sm:$0xff]
        %v929 = vld [vmem:[#allocation5 + $0x64] sm:$0xff]
        %v930 = vld [vmem:[#allocation5 + $0x6c] sm:$0xf]
        %v931 = vld [vmem:[#allocation5 + $0x70] sm:$0xff]
        %v932 = vld [vmem:[#allocation5 + $0x78] sm:$0xff]
        %v933 = vld [vmem:[#allocation5 + $0x80] sm:$0xff]
        %v934 = vld [vmem:[#allocation5 + $0x88] sm:$0xf]
        %v935 = vld [vmem:[#allocation5 + $0x8c] sm:$0xff]
        %v936 = vld [vmem:[#allocation5 + $0x94] sm:$0xff]
        %v937 = vld [vmem:[#allocation5 + $0x9c] sm:$0xff]
        %v938 = vld [vmem:[#allocation5 + $0xa4] sm:$0xf]
        %v939 = vld [vmem:[#allocation5 + $0xa8] sm:$0xff]
        %v940 = vld [vmem:[#allocation5 + $0xb0] sm:$0xff]
        %v941 = vld [vmem:[#allocation5 + $0xb8] sm:$0xff]
        %v942 = vld [vmem:[#allocation5 + $0xc0] sm:$0xf]
        %v943 = vld [vmem:[#allocation5 + $0xc4] sm:$0xff]
        %v944 = vld [vmem:[#allocation5 + $0xcc] sm:$0xff]
        %v945 = vld [vmem:[#allocation5 + $0xd4] sm:$0xff]
        %v946 = vld [vmem:[#allocation5 + $0xdc] sm:$0xf]
        %v947 = vld [vmem:[#allocation5 + $0xe0] sm:$0xff]
        %v948 = vld [vmem:[#allocation5 + $0xe8] sm:$0xff]
        %v949 = vld [vmem:[#allocation5 + $0xf0] sm:$0xff]
        %v950 = vld [vmem:[#allocation5 + $0xf8] sm:$0xf]
        %v951 = vld [vmem:[#allocation5 + $0xfc] sm:$0xff]
        %v952 = vld [vmem:[#allocation5 + $0x104] sm:$0xff]
        %v953 = vld [vmem:[#allocation5 + $0x10c] sm:$0xff]
        %v954 = vld [vmem:[#allocation5 + $0x114] sm:$0xf]
        %v955 = vld [vmem:[#allocation5 + $0x118] sm:$0xff]
        %v956 = vld [vmem:[#allocation5 + $0x120] sm:$0xff]
        %v957 = vld [vmem:[#allocation5 + $0x128] sm:$0xff]
        %v958 = vld [vmem:[#allocation5 + $0x130] sm:$0xf]
        %v959 = vld [vmem:[#allocation5 + $0x134] sm:$0xff]
        %v960 = vld [vmem:[#allocation5 + $0x13c] sm:$0xff]
        %v961 = vld [vmem:[#allocation5 + $0x144] sm:$0xff]
        %v962 = vld [vmem:[#allocation5 + $0x14c] sm:$0xf]
        %v963 = vld [vmem:[#allocation5 + $0x150] sm:$0xff]
        %v964 = vld [vmem:[#allocation5 + $0x158] sm:$0xff]
        %v965 = vld [vmem:[#allocation5 + $0x160] sm:$0xff]
        %v966 = vld [vmem:[#allocation5 + $0x168] sm:$0xf]
        %v967 = vld [vmem:[#allocation5 + $0x16c] sm:$0xff]
        %v968 = vld [vmem:[#allocation5 + $0x174] sm:$0xff]
        %v969 = vld [vmem:[#allocation5 + $0x17c] sm:$0xff]
        %v970 = vld [vmem:[#allocation5 + $0x184] sm:$0xf]
        %v971 = vld [vmem:[#allocation5 + $0x188] sm:$0xff]
        %v972 = vld [vmem:[#allocation5 + $0x190] sm:$0xff]
        %v973 = vld [vmem:[#allocation5 + $0x198] sm:$0xff]
        %v974 = vld [vmem:[#allocation5 + $0x1a0] sm:$0xf]
        %v975 = vld [vmem:[#allocation5 + $0x1a4] sm:$0xff]
        %v976 = vld [vmem:[#allocation5 + $0x1ac] sm:$0xff]
        %v977 = vld [vmem:[#allocation5 + $0x1b4] sm:$0xff]
        %v978 = vld [vmem:[#allocation5 + $0x1bc] sm:$0xf]
        %v979 = vld [vmem:[#allocation5 + $0x1c0] sm:$0xff]
        %v980 = vld [vmem:[#allocation5 + $0x1c8] sm:$0xff]
        %v981 = vld [vmem:[#allocation5 + $0x1d0] sm:$0xff]
        %v982 = vld [vmem:[#allocation5 + $0x1d8] sm:$0xf]
        %v983 = vld [vmem:[#allocation5 + $0x1dc] sm:$0xff]
        %v984 = vld [vmem:[#allocation5 + $0x1e4] sm:$0xff]
        %v985 = vld [vmem:[#allocation5 + $0x1ec] sm:$0xff]
        %v986 = vld [vmem:[#allocation5 + $0x1f4] sm:$0xf]
        %v987 = vld [vmem:[#allocation5 + $0x1f8] sm:$0xff]
        %v988 = vld [vmem:[#allocation5 + $0x200] sm:$0xff]
        %v989 = vld [vmem:[#allocation5 + $0x208] sm:$0xff]
        %v990 = vld [vmem:[#allocation5 + $0x210] sm:$0xf]
        %v991 = vld [vmem:[#allocation5 + $0x214] sm:$0xff]
        %v992 = vld [vmem:[#allocation5 + $0x21c] sm:$0xff]
        %v993 = vld [vmem:[#allocation5 + $0x224] sm:$0xff]
        %v994 = vld [vmem:[#allocation5 + $0x22c] sm:$0xf]
        %v995 = vld [vmem:[#allocation5 + $0x230] sm:$0xff]
        %v996 = vld [vmem:[#allocation5 + $0x238] sm:$0xff]
        %v997 = vld [vmem:[#allocation5 + $0x240] sm:$0xff]
        %v998 = vld [vmem:[#allocation5 + $0x248] sm:$0xf]
        %v999 = vld [vmem:[#allocation5 + $0x24c] sm:$0xff]
        %v1000 = vld [vmem:[#allocation5 + $0x254] sm:$0xff]
        %v1001 = vld [vmem:[#allocation5 + $0x25c] sm:$0xff]
        %v1002 = vld [vmem:[#allocation5 + $0x264] sm:$0xf]
        %v1003 = vld [vmem:[#allocation5 + $0x268] sm:$0xff]
        %v1004 = vld [vmem:[#allocation5 + $0x270] sm:$0xff]
        %v1005 = vld [vmem:[#allocation5 + $0x278] sm:$0xff]
        %v1006 = vld [vmem:[#allocation5 + $0x280] sm:$0xf]
        %v1007 = vld [vmem:[#allocation5 + $0x284] sm:$0xff]
        %v1008 = vld [vmem:[#allocation5 + $0x28c] sm:$0xff]
        %v1009 = vld [vmem:[#allocation5 + $0x294] sm:$0xff]
        %v1010 = vld [vmem:[#allocation5 + $0x29c] sm:$0xf]
        %v1011 = vld [vmem:[#allocation5 + $0x2a0] sm:$0xff]
        %v1012 = vld [vmem:[#allocation5 + $0x2a8] sm:$0xff]
        %v1013 = vld [vmem:[#allocation5 + $0x2b0] sm:$0xff]
        %v1014 = vld [vmem:[#allocation5 + $0x2b8] sm:$0xf]
        %v1015 = vld [vmem:[#allocation5 + $0x2bc] sm:$0xff]
        %v1016 = vld [vmem:[#allocation5 + $0x2c4] sm:$0xff]
        %v1017 = vld [vmem:[#allocation5 + $0x2cc] sm:$0xff]
        %v1018 = vld [vmem:[#allocation5 + $0x2d4] sm:$0xf]
        %v1019 = vld [vmem:[#allocation5 + $0x2d8] sm:$0xff]
        %v1020 = vld [vmem:[#allocation5 + $0x2e0] sm:$0xff]
        %v1021 = vld [vmem:[#allocation5 + $0x2e8] sm:$0xff]
        %v1022 = vld [vmem:[#allocation5 + $0x2f0] sm:$0xf]
        %v1023 = vld [vmem:[#allocation5 + $0x2f4] sm:$0xff]
        %v1024 = vld [vmem:[#allocation5 + $0x2fc] sm:$0xff]
        %v1025 = vld [vmem:[#allocation5 + $0x304] sm:$0xff]
        %v1026 = vld [vmem:[#allocation5 + $0x30c] sm:$0xf]
        %v1027 = vld [vmem:[#allocation5 + $0x310] sm:$0xff]
        %v1028 = vld [vmem:[#allocation5 + $0x318] sm:$0xff]
        %v1029 = vld [vmem:[#allocation5 + $0x320] sm:$0xff]
        %v1030 = vld [vmem:[#allocation5 + $0x328] sm:$0xf]
        %v1031 = vld [vmem:[#allocation5 + $0x32c] sm:$0xff]
        %v1032 = vld [vmem:[#allocation5 + $0x334] sm:$0xff]
        %v1033 = vld [vmem:[#allocation5 + $0x33c] sm:$0xff]
        %v1034 = vld [vmem:[#allocation5 + $0x344] sm:$0xf]
        %v1035 = vld [vmem:[#allocation5 + $0x348] sm:$0xff]
        %v1036 = vld [vmem:[#allocation5 + $0x350] sm:$0xff]
        %v1037 = vld [vmem:[#allocation5 + $0x358] sm:$0xff]
        %v1038 = vld [vmem:[#allocation5 + $0x360] sm:$0xf]
        %v1039 = vld [vmem:[#allocation5 + $0x364] sm:$0xff]
        %v1040 = vld [vmem:[#allocation5 + $0x36c] sm:$0xff]
        %v1041 = vld [vmem:[#allocation5 + $0x374] sm:$0xff]
        %v1042 = vld [vmem:[#allocation5 + $0x37c] sm:$0xf]
        %v1043 = vld [vmem:[#allocation5 + $0x380] sm:$0xff]
        %v1044 = vld [vmem:[#allocation5 + $0x388] sm:$0xff]
        %v1045 = vld [vmem:[#allocation5 + $0x390] sm:$0xff]
        %v1046 = vld [vmem:[#allocation5 + $0x398] sm:$0xf]
        %v1047 = vld [vmem:[#allocation5 + $0x39c] sm:$0xff]
        %v1048 = vld [vmem:[#allocation5 + $0x3a4] sm:$0xff]
        %v1049 = vld [vmem:[#allocation5 + $0x3ac] sm:$0xff]
        %v1050 = vld [vmem:[#allocation5 + $0x3b4] sm:$0xf]
        %v1051 = vld [vmem:[#allocation5 + $0x3b8] sm:$0xff]
        %v1052 = vld [vmem:[#allocation5 + $0x3c0] sm:$0xff]
        %v1053 = vld [vmem:[#allocation5 + $0x3c8] sm:$0xff]
        %v1054 = vld [vmem:[#allocation5 + $0x3d0] sm:$0xf]
        %v1055 = vld [vmem:[#allocation5 + $0x3d4] sm:$0xff]
        %v1056 = vld [vmem:[#allocation5 + $0x3dc] sm:$0xff]
        %v1057 = vld [vmem:[#allocation5 + $0x3e4] sm:$0xff]
        %v1058 = vld [vmem:[#allocation5 + $0x3ec] sm:$0xf]
        %v1059 = vld [vmem:[#allocation5 + $0x3f0] sm:$0xff]
        %v1060 = vld [vmem:[#allocation5 + $0x3f8] sm:$0xff]
        %v1061 = vld [vmem:[#allocation5 + $0x400] sm:$0xff]
        %v1062 = vld [vmem:[#allocation5 + $0x408] sm:$0xf]
        %v1063 = vld [vmem:[#allocation5 + $0x40c] sm:$0xff]
        %v1064 = vld [vmem:[#allocation5 + $0x414] sm:$0xff]
        %v1065 = vld [vmem:[#allocation5 + $0x41c] sm:$0xff]
        %v1066 = vld [vmem:[#allocation5 + $0x424] sm:$0xf]
        %v1067 = vld [vmem:[#allocation5 + $0x428] sm:$0xff]
        %v1068 = vld [vmem:[#allocation5 + $0x430] sm:$0xff]
        %v1069 = vld [vmem:[#allocation5 + $0x438] sm:$0xff]
        %v1070 = vld [vmem:[#allocation5 + $0x440] sm:$0xf]
        %v1071 = vld [vmem:[#allocation5 + $0x444] sm:$0xff]
        %v1072 = vld [vmem:[#allocation5 + $0x44c] sm:$0xff]
        %v1073 = vld [vmem:[#allocation5 + $0x454] sm:$0xff]
        %v1074 = vld [vmem:[#allocation5 + $0x45c] sm:$0xf]
        %v1075 = vld [vmem:[#allocation5 + $0x460] sm:$0xff]
        %v1076 = vld [vmem:[#allocation5 + $0x468] sm:$0xff]
        %v1077 = vld [vmem:[#allocation5 + $0x470] sm:$0xff]
        %v1078 = vld [vmem:[#allocation5 + $0x478] sm:$0xf]
        %v1079 = vld [vmem:[#allocation5 + $0x47c] sm:$0xff]
        %v1080 = vld [vmem:[#allocation5 + $0x484] sm:$0xff]
        %v1081 = vld [vmem:[#allocation5 + $0x48c] sm:$0xff]
        %v1082 = vld [vmem:[#allocation5 + $0x494] sm:$0xf]
        %v1083 = vld [vmem:[#allocation5 + $0x498] sm:$0xff]
        %v1084 = vld [vmem:[#allocation5 + $0x4a0] sm:$0xff]
        %v1085 = vld [vmem:[#allocation5 + $0x4a8] sm:$0xff]
        %v1086 = vld [vmem:[#allocation5 + $0x4b0] sm:$0xf]
        %v1087 = vld [vmem:[#allocation5 + $0x4b4] sm:$0xff]
        %v1088 = vld [vmem:[#allocation5 + $0x4bc] sm:$0xff]
        %v1089 = vld [vmem:[#allocation5 + $0x4c4] sm:$0xff]
        %v1090 = vld [vmem:[#allocation5 + $0x4cc] sm:$0xf]
        %v1091 = vld [vmem:[#allocation5 + $0x4d0] sm:$0xff]
        %v1092 = vld [vmem:[#allocation5 + $0x4d8] sm:$0xff]
        %v1093 = vld [vmem:[#allocation5 + $0x4e0] sm:$0xff]
        %v1094 = vld [vmem:[#allocation5 + $0x4e8] sm:$0xf]
        %v1095 = vld [vmem:[#allocation5 + $0x4ec] sm:$0xff]
        %v1096 = vld [vmem:[#allocation5 + $0x4f4] sm:$0xff]
        %v1097 = vld [vmem:[#allocation5 + $0x4fc] sm:$0xff]
        %v1098 = vld [vmem:[#allocation5 + $0x504] sm:$0xf]
        %v1099 = vld [vmem:[#allocation5 + $0x508] sm:$0xff]
        %v1100 = vld [vmem:[#allocation5 + $0x510] sm:$0xff]
        %v1101 = vld [vmem:[#allocation5 + $0x518] sm:$0xff]
        %v1102 = vld [vmem:[#allocation5 + $0x520] sm:$0xf]
        %v1103 = vld [vmem:[#allocation5 + $0x524] sm:$0xff]
        %v1104 = vld [vmem:[#allocation5 + $0x52c] sm:$0xff]
        %v1105 = vld [vmem:[#allocation5 + $0x534] sm:$0xff]
        %v1106 = vld [vmem:[#allocation5 + $0x53c] sm:$0xf]
        %v1299 = vunpack.c.l.b16 %v915
        %v1300 = vunpack.c.h.b16 %v915
        %v1301 = vunpack.c.l.b16 %v916
        %v1302 = vunpack.c.h.b16 %v916
        %v1303 = vunpack.c.l.b16 %v917
        %v1304 = vunpack.c.h.b16 %v917
        %v1305 = vunpack.c.l.b16 %v918
        %v1306 = vunpack.c.l.b16 %v919
        %v1307 = vunpack.c.h.b16 %v919
        %v1308 = vunpack.c.l.b16 %v920
        %v1309 = vunpack.c.h.b16 %v920
        %v1310 = vunpack.c.l.b16 %v921
        %v1311 = vunpack.c.h.b16 %v921
        %v1312 = vunpack.c.l.b16 %v922
        %v1313 = vunpack.c.l.b16 %v923
        %v1314 = vunpack.c.h.b16 %v923
        %v1315 = vunpack.c.l.b16 %v924
        %v1316 = vunpack.c.h.b16 %v924
        %v1317 = vunpack.c.l.b16 %v925
        %v1318 = vunpack.c.h.b16 %v925
        %v1319 = vunpack.c.l.b16 %v926
        %v1320 = vunpack.c.l.b16 %v927
        %v1321 = vunpack.c.h.b16 %v927
        %v1322 = vunpack.c.l.b16 %v928
        %v1323 = vunpack.c.h.b16 %v928
        %v1324 = vunpack.c.l.b16 %v929
        %v1325 = vunpack.c.h.b16 %v929
        %v1326 = vunpack.c.l.b16 %v930
        %v1327 = vunpack.c.l.b16 %v931
        %v1328 = vunpack.c.h.b16 %v931
        %v1329 = vunpack.c.l.b16 %v932
        %v1330 = vunpack.c.h.b16 %v932
        %v1331 = vunpack.c.l.b16 %v933
        %v1332 = vunpack.c.h.b16 %v933
        %v1333 = vunpack.c.l.b16 %v934
        %v1334 = vunpack.c.l.b16 %v935
        %v1335 = vunpack.c.h.b16 %v935
        %v1336 = vunpack.c.l.b16 %v936
        %v1337 = vunpack.c.h.b16 %v936
        %v1338 = vunpack.c.l.b16 %v937
        %v1339 = vunpack.c.h.b16 %v937
        %v1340 = vunpack.c.l.b16 %v938
        %v1341 = vunpack.c.l.b16 %v939
        %v1342 = vunpack.c.h.b16 %v939
        %v1343 = vunpack.c.l.b16 %v940
        %v1344 = vunpack.c.h.b16 %v940
        %v1345 = vunpack.c.l.b16 %v941
        %v1346 = vunpack.c.h.b16 %v941
        %v1347 = vunpack.c.l.b16 %v942
        %v1348 = vunpack.c.l.b16 %v943
        %v1349 = vunpack.c.h.b16 %v943
        %v1350 = vunpack.c.l.b16 %v944
        %v1351 = vunpack.c.h.b16 %v944
        %v1352 = vunpack.c.l.b16 %v945
        %v1353 = vunpack.c.h.b16 %v945
        %v1354 = vunpack.c.l.b16 %v946
        %v1355 = vunpack.c.l.b16 %v947
        %v1356 = vunpack.c.h.b16 %v947
        %v1357 = vunpack.c.l.b16 %v948
        %v1358 = vunpack.c.h.b16 %v948
        %v1359 = vunpack.c.l.b16 %v949
        %v1360 = vunpack.c.h.b16 %v949
        %v1361 = vunpack.c.l.b16 %v950
        %v1362 = vunpack.c.l.b16 %v951
        %v1363 = vunpack.c.h.b16 %v951
        %v1364 = vunpack.c.l.b16 %v952
        %v1365 = vunpack.c.h.b16 %v952
        %v1366 = vunpack.c.l.b16 %v953
        %v1367 = vunpack.c.h.b16 %v953
        %v1368 = vunpack.c.l.b16 %v954
        %v1369 = vunpack.c.l.b16 %v955
        %v1370 = vunpack.c.h.b16 %v955
        %v1371 = vunpack.c.l.b16 %v956
        %v1372 = vunpack.c.h.b16 %v956
        %v1373 = vunpack.c.l.b16 %v957
        %v1374 = vunpack.c.h.b16 %v957
        %v1375 = vunpack.c.l.b16 %v958
        %v1376 = vunpack.c.l.b16 %v959
        %v1377 = vunpack.c.h.b16 %v959
        %v1378 = vunpack.c.l.b16 %v960
        %v1379 = vunpack.c.h.b16 %v960
        %v1380 = vunpack.c.l.b16 %v961
        %v1381 = vunpack.c.h.b16 %v961
        %v1382 = vunpack.c.l.b16 %v962
        %v1383 = vunpack.c.l.b16 %v963
        %v1384 = vunpack.c.h.b16 %v963
        %v1385 = vunpack.c.l.b16 %v964
        %v1386 = vunpack.c.h.b16 %v964
        %v1387 = vunpack.c.l.b16 %v965
        %v1388 = vunpack.c.h.b16 %v965
        %v1389 = vunpack.c.l.b16 %v966
        %v1390 = vunpack.c.l.b16 %v967
        %v1391 = vunpack.c.h.b16 %v967
        %v1392 = vunpack.c.l.b16 %v968
        %v1393 = vunpack.c.h.b16 %v968
        %v1394 = vunpack.c.l.b16 %v969
        %v1395 = vunpack.c.h.b16 %v969
        %v1396 = vunpack.c.l.b16 %v970
        %v1397 = vunpack.c.l.b16 %v971
        %v1398 = vunpack.c.h.b16 %v971
        %v1399 = vunpack.c.l.b16 %v972
        %v1400 = vunpack.c.h.b16 %v972
        %v1401 = vunpack.c.l.b16 %v973
        %v1402 = vunpack.c.h.b16 %v973
        %v1403 = vunpack.c.l.b16 %v974
        %v1404 = vunpack.c.l.b16 %v975
        %v1405 = vunpack.c.h.b16 %v975
        %v1406 = vunpack.c.l.b16 %v976
        %v1407 = vunpack.c.h.b16 %v976
        %v1408 = vunpack.c.l.b16 %v977
        %v1409 = vunpack.c.h.b16 %v977
        %v1410 = vunpack.c.l.b16 %v978
        %v1411 = vunpack.c.l.b16 %v979
        %v1412 = vunpack.c.h.b16 %v979
        %v1413 = vunpack.c.l.b16 %v980
        %v1414 = vunpack.c.h.b16 %v980
        %v1415 = vunpack.c.l.b16 %v981
        %v1416 = vunpack.c.h.b16 %v981
        %v1417 = vunpack.c.l.b16 %v982
        %v1418 = vunpack.c.l.b16 %v983
        %v1419 = vunpack.c.h.b16 %v983
        %v1420 = vunpack.c.l.b16 %v984
        %v1421 = vunpack.c.h.b16 %v984
        %v1422 = vunpack.c.l.b16 %v985
        %v1423 = vunpack.c.h.b16 %v985
        %v1424 = vunpack.c.l.b16 %v986
        %v1425 = vunpack.c.l.b16 %v987
        %v1426 = vunpack.c.h.b16 %v987
        %v1427 = vunpack.c.l.b16 %v988
        %v1428 = vunpack.c.h.b16 %v988
        %v1429 = vunpack.c.l.b16 %v989
        %v1430 = vunpack.c.h.b16 %v989
        %v1431 = vunpack.c.l.b16 %v990
        %v1432 = vunpack.c.l.b16 %v991
        %v1433 = vunpack.c.h.b16 %v991
        %v1434 = vunpack.c.l.b16 %v992
        %v1435 = vunpack.c.h.b16 %v992
        %v1436 = vunpack.c.l.b16 %v993
        %v1437 = vunpack.c.h.b16 %v993
        %v1438 = vunpack.c.l.b16 %v994
        %v1439 = vunpack.c.l.b16 %v995
        %v1440 = vunpack.c.h.b16 %v995
        %v1441 = vunpack.c.l.b16 %v996
        %v1442 = vunpack.c.h.b16 %v996
        %v1443 = vunpack.c.l.b16 %v997
        %v1444 = vunpack.c.h.b16 %v997
        %v1445 = vunpack.c.l.b16 %v998
        %v1446 = vunpack.c.l.b16 %v999
        %v1447 = vunpack.c.h.b16 %v999
        %v1448 = vunpack.c.l.b16 %v1000
        %v1449 = vunpack.c.h.b16 %v1000
        %v1450 = vunpack.c.l.b16 %v1001
        %v1451 = vunpack.c.h.b16 %v1001
        %v1452 = vunpack.c.l.b16 %v1002
        %v1453 = vunpack.c.l.b16 %v1003
        %v1454 = vunpack.c.h.b16 %v1003
        %v1455 = vunpack.c.l.b16 %v1004
        %v1456 = vunpack.c.h.b16 %v1004
        %v1457 = vunpack.c.l.b16 %v1005
        %v1458 = vunpack.c.h.b16 %v1005
        %v1459 = vunpack.c.l.b16 %v1006
        %v1460 = vunpack.c.l.b16 %v1007
        %v1461 = vunpack.c.h.b16 %v1007
        %v1462 = vunpack.c.l.b16 %v1008
        %v1463 = vunpack.c.h.b16 %v1008
        %v1464 = vunpack.c.l.b16 %v1009
        %v1465 = vunpack.c.h.b16 %v1009
        %v1466 = vunpack.c.l.b16 %v1010
        %v1467 = vunpack.c.l.b16 %v1011
        %v1468 = vunpack.c.h.b16 %v1011
        %v1469 = vunpack.c.l.b16 %v1012
        %v1470 = vunpack.c.h.b16 %v1012
        %v1471 = vunpack.c.l.b16 %v1013
        %v1472 = vunpack.c.h.b16 %v1013
        %v1473 = vunpack.c.l.b16 %v1014
        %v1474 = vunpack.c.l.b16 %v1015
        %v1475 = vunpack.c.h.b16 %v1015
        %v1476 = vunpack.c.l.b16 %v1016
        %v1477 = vunpack.c.h.b16 %v1016
        %v1478 = vunpack.c.l.b16 %v1017
        %v1479 = vunpack.c.h.b16 %v1017
        %v1480 = vunpack.c.l.b16 %v1018
        %v1481 = vunpack.c.l.b16 %v1019
        %v1482 = vunpack.c.h.b16 %v1019
        %v1483 = vunpack.c.l.b16 %v1020
        %v1484 = vunpack.c.h.b16 %v1020
        %v1485 = vunpack.c.l.b16 %v1021
        %v1486 = vunpack.c.h.b16 %v1021
        %v1487 = vunpack.c.l.b16 %v1022
        %v1488 = vunpack.c.l.b16 %v1023
        %v1489 = vunpack.c.h.b16 %v1023
        %v1490 = vunpack.c.l.b16 %v1024
        %v1491 = vunpack.c.h.b16 %v1024
        %v1492 = vunpack.c.l.b16 %v1025
        %v1493 = vunpack.c.h.b16 %v1025
        %v1494 = vunpack.c.l.b16 %v1026
        %v1495 = vunpack.c.l.b16 %v1027
        %v1496 = vunpack.c.h.b16 %v1027
        %v1497 = vunpack.c.l.b16 %v1028
        %v1498 = vunpack.c.h.b16 %v1028
        %v1499 = vunpack.c.l.b16 %v1029
        %v1500 = vunpack.c.h.b16 %v1029
        %v1501 = vunpack.c.l.b16 %v1030
        %v1502 = vunpack.c.l.b16 %v1031
        %v1503 = vunpack.c.h.b16 %v1031
        %v1504 = vunpack.c.l.b16 %v1032
        %v1505 = vunpack.c.h.b16 %v1032
        %v1506 = vunpack.c.l.b16 %v1033
        %v1507 = vunpack.c.h.b16 %v1033
        %v1508 = vunpack.c.l.b16 %v1034
        %v1509 = vunpack.c.l.b16 %v1035
        %v1510 = vunpack.c.h.b16 %v1035
        %v1511 = vunpack.c.l.b16 %v1036
        %v1512 = vunpack.c.h.b16 %v1036
        %v1513 = vunpack.c.l.b16 %v1037
        %v1514 = vunpack.c.h.b16 %v1037
        %v1515 = vunpack.c.l.b16 %v1038
        %v1516 = vunpack.c.l.b16 %v1039
        %v1517 = vunpack.c.h.b16 %v1039
        %v1518 = vunpack.c.l.b16 %v1040
        %v1519 = vunpack.c.h.b16 %v1040
        %v1520 = vunpack.c.l.b16 %v1041
        %v1521 = vunpack.c.h.b16 %v1041
        %v1522 = vunpack.c.l.b16 %v1042
        %v1523 = vunpack.c.l.b16 %v1043
        %v1524 = vunpack.c.h.b16 %v1043
        %v1525 = vunpack.c.l.b16 %v1044
        %v1526 = vunpack.c.h.b16 %v1044
        %v1527 = vunpack.c.l.b16 %v1045
        %v1528 = vunpack.c.h.b16 %v1045
        %v1529 = vunpack.c.l.b16 %v1046
        %v1530 = vunpack.c.l.b16 %v1047
        %v1531 = vunpack.c.h.b16 %v1047
        %v1532 = vunpack.c.l.b16 %v1048
        %v1533 = vunpack.c.h.b16 %v1048
        %v1534 = vunpack.c.l.b16 %v1049
        %v1535 = vunpack.c.h.b16 %v1049
        %v1536 = vunpack.c.l.b16 %v1050
        %v1537 = vunpack.c.l.b16 %v1051
        %v1538 = vunpack.c.h.b16 %v1051
        %v1539 = vunpack.c.l.b16 %v1052
        %v1540 = vunpack.c.h.b16 %v1052
        %v1541 = vunpack.c.l.b16 %v1053
        %v1542 = vunpack.c.h.b16 %v1053
        %v1543 = vunpack.c.l.b16 %v1054
        %v1544 = vunpack.c.l.b16 %v1055
        %v1545 = vunpack.c.h.b16 %v1055
        %v1546 = vunpack.c.l.b16 %v1056
        %v1547 = vunpack.c.h.b16 %v1056
        %v1548 = vunpack.c.l.b16 %v1057
        %v1549 = vunpack.c.h.b16 %v1057
        %v1550 = vunpack.c.l.b16 %v1058
        %v1551 = vunpack.c.l.b16 %v1059
        %v1552 = vunpack.c.h.b16 %v1059
        %v1553 = vunpack.c.l.b16 %v1060
        %v1554 = vunpack.c.h.b16 %v1060
        %v1555 = vunpack.c.l.b16 %v1061
        %v1556 = vunpack.c.h.b16 %v1061
        %v1557 = vunpack.c.l.b16 %v1062
        %v1558 = vunpack.c.l.b16 %v1063
        %v1559 = vunpack.c.h.b16 %v1063
        %v1560 = vunpack.c.l.b16 %v1064
        %v1561 = vunpack.c.h.b16 %v1064
        %v1562 = vunpack.c.l.b16 %v1065
        %v1563 = vunpack.c.h.b16 %v1065
        %v1564 = vunpack.c.l.b16 %v1066
        %v1565 = vunpack.c.l.b16 %v1067
        %v1566 = vunpack.c.h.b16 %v1067
        %v1567 = vunpack.c.l.b16 %v1068
        %v1568 = vunpack.c.h.b16 %v1068
        %v1569 = vunpack.c.l.b16 %v1069
        %v1570 = vunpack.c.h.b16 %v1069
        %v1571 = vunpack.c.l.b16 %v1070
        %v1572 = vunpack.c.l.b16 %v1071
        %v1573 = vunpack.c.h.b16 %v1071
        %v1574 = vunpack.c.l.b16 %v1072
        %v1575 = vunpack.c.h.b16 %v1072
        %v1576 = vunpack.c.l.b16 %v1073
        %v1577 = vunpack.c.h.b16 %v1073
        %v1578 = vunpack.c.l.b16 %v1074
        %v1579 = vunpack.c.l.b16 %v1075
        %v1580 = vunpack.c.h.b16 %v1075
        %v1581 = vunpack.c.l.b16 %v1076
        %v1582 = vunpack.c.h.b16 %v1076
        %v1583 = vunpack.c.l.b16 %v1077
        %v1584 = vunpack.c.h.b16 %v1077
        %v1585 = vunpack.c.l.b16 %v1078
        %v1586 = vunpack.c.l.b16 %v1079
        %v1587 = vunpack.c.h.b16 %v1079
        %v1588 = vunpack.c.l.b16 %v1080
        %v1589 = vunpack.c.h.b16 %v1080
        %v1590 = vunpack.c.l.b16 %v1081
        %v1591 = vunpack.c.h.b16 %v1081
        %v1592 = vunpack.c.l.b16 %v1082
        %v1593 = vunpack.c.l.b16 %v1083
        %v1594 = vunpack.c.h.b16 %v1083
        %v1595 = vunpack.c.l.b16 %v1084
        %v1596 = vunpack.c.h.b16 %v1084
        %v1597 = vunpack.c.l.b16 %v1085
        %v1598 = vunpack.c.h.b16 %v1085
        %v1599 = vunpack.c.l.b16 %v1086
        %v1600 = vunpack.c.l.b16 %v1087
        %v1601 = vunpack.c.h.b16 %v1087
        %v1602 = vunpack.c.l.b16 %v1088
        %v1603 = vunpack.c.h.b16 %v1088
        %v1604 = vunpack.c.l.b16 %v1089
        %v1605 = vunpack.c.h.b16 %v1089
        %v1606 = vunpack.c.l.b16 %v1090
        %v1607 = vunpack.c.l.b16 %v1091
        %v1608 = vunpack.c.h.b16 %v1091
        %v1609 = vunpack.c.l.b16 %v1092
        %v1610 = vunpack.c.h.b16 %v1092
        %v1611 = vunpack.c.l.b16 %v1093
        %v1612 = vunpack.c.h.b16 %v1093
        %v1613 = vunpack.c.l.b16 %v1094
        %v1614 = vunpack.c.l.b16 %v1095
        %v1615 = vunpack.c.h.b16 %v1095
        %v1616 = vunpack.c.l.b16 %v1096
        %v1617 = vunpack.c.h.b16 %v1096
        %v1618 = vunpack.c.l.b16 %v1097
        %v1619 = vunpack.c.h.b16 %v1097
        %v1620 = vunpack.c.l.b16 %v1098
        %v1621 = vunpack.c.l.b16 %v1099
        %v1622 = vunpack.c.h.b16 %v1099
        %v1623 = vunpack.c.l.b16 %v1100
        %v1624 = vunpack.c.h.b16 %v1100
        %v1625 = vunpack.c.l.b16 %v1101
        %v1626 = vunpack.c.h.b16 %v1101
        %v1627 = vunpack.c.l.b16 %v1102
        %v1628 = vunpack.c.l.b16 %v1103
        %v1629 = vunpack.c.h.b16 %v1103
        %v1630 = vunpack.c.l.b16 %v1104
        %v1631 = vunpack.c.h.b16 %v1104
        %v1632 = vunpack.c.l.b16 %v1105
        %v1633 = vunpack.c.h.b16 %v1105
        %v1634 = vunpack.c.l.b16 %v1106
        %v1635 = vpack.c.b16 %v1306, %v1299
        %v1636 = vpack.c.b16 %v1307, %v1300
        %v1637 = vpack.c.b16 %v1308, %v1301
        %v1638 = vpack.c.b16 %v1309, %v1302
        %v1639 = vpack.c.b16 %v1310, %v1303
        %v1640 = vpack.c.b16 %v1311, %v1304
        %v1641 = vpack.c.b16 %v1312, %v1305
        %v1642 = vpack.c.b16 %v1320, %v1313
        %v1643 = vpack.c.b16 %v1321, %v1314
        %v1644 = vpack.c.b16 %v1322, %v1315
        %v1645 = vpack.c.b16 %v1323, %v1316
        %v1646 = vpack.c.b16 %v1324, %v1317
        %v1647 = vpack.c.b16 %v1325, %v1318
        %v1648 = vpack.c.b16 %v1326, %v1319
        %v1649 = vpack.c.b16 %v1334, %v1327
        %v1650 = vpack.c.b16 %v1335, %v1328
        %v1651 = vpack.c.b16 %v1336, %v1329
        %v1652 = vpack.c.b16 %v1337, %v1330
        %v1653 = vpack.c.b16 %v1338, %v1331
        %v1654 = vpack.c.b16 %v1339, %v1332
        %v1655 = vpack.c.b16 %v1340, %v1333
        %v1656 = vpack.c.b16 %v1348, %v1341
        %v1657 = vpack.c.b16 %v1349, %v1342
        %v1658 = vpack.c.b16 %v1350, %v1343
        %v1659 = vpack.c.b16 %v1351, %v1344
        %v1660 = vpack.c.b16 %v1352, %v1345
        %v1661 = vpack.c.b16 %v1353, %v1346
        %v1662 = vpack.c.b16 %v1354, %v1347
        %v1663 = vpack.c.b16 %v1362, %v1355
        %v1664 = vpack.c.b16 %v1363, %v1356
        %v1665 = vpack.c.b16 %v1364, %v1357
        %v1666 = vpack.c.b16 %v1365, %v1358
        %v1667 = vpack.c.b16 %v1366, %v1359
        %v1668 = vpack.c.b16 %v1367, %v1360
        %v1669 = vpack.c.b16 %v1368, %v1361
        %v1670 = vpack.c.b16 %v1376, %v1369
        %v1671 = vpack.c.b16 %v1377, %v1370
        %v1672 = vpack.c.b16 %v1378, %v1371
        %v1673 = vpack.c.b16 %v1379, %v1372
        %v1674 = vpack.c.b16 %v1380, %v1373
        %v1675 = vpack.c.b16 %v1381, %v1374
        %v1676 = vpack.c.b16 %v1382, %v1375
        %v1677 = vpack.c.b16 %v1390, %v1383
        %v1678 = vpack.c.b16 %v1391, %v1384
        %v1679 = vpack.c.b16 %v1392, %v1385
        %v1680 = vpack.c.b16 %v1393, %v1386
        %v1681 = vpack.c.b16 %v1394, %v1387
        %v1682 = vpack.c.b16 %v1395, %v1388
        %v1683 = vpack.c.b16 %v1396, %v1389
        %v1684 = vpack.c.b16 %v1404, %v1397
        %v1685 = vpack.c.b16 %v1405, %v1398
        %v1686 = vpack.c.b16 %v1406, %v1399
        %v1687 = vpack.c.b16 %v1407, %v1400
        %v1688 = vpack.c.b16 %v1408, %v1401
        %v1689 = vpack.c.b16 %v1409, %v1402
        %v1690 = vpack.c.b16 %v1410, %v1403
        %v1691 = vpack.c.b16 %v1418, %v1411
        %v1692 = vpack.c.b16 %v1419, %v1412
        %v1693 = vpack.c.b16 %v1420, %v1413
        %v1694 = vpack.c.b16 %v1421, %v1414
        %v1695 = vpack.c.b16 %v1422, %v1415
        %v1696 = vpack.c.b16 %v1423, %v1416
        %v1697 = vpack.c.b16 %v1424, %v1417
        %v1698 = vpack.c.b16 %v1432, %v1425
        %v1699 = vpack.c.b16 %v1433, %v1426
        %v1700 = vpack.c.b16 %v1434, %v1427
        %v1701 = vpack.c.b16 %v1435, %v1428
        %v1702 = vpack.c.b16 %v1436, %v1429
        %v1703 = vpack.c.b16 %v1437, %v1430
        %v1704 = vpack.c.b16 %v1438, %v1431
        %v1705 = vpack.c.b16 %v1446, %v1439
        %v1706 = vpack.c.b16 %v1447, %v1440
        %v1707 = vpack.c.b16 %v1448, %v1441
        %v1708 = vpack.c.b16 %v1449, %v1442
        %v1709 = vpack.c.b16 %v1450, %v1443
        %v1710 = vpack.c.b16 %v1451, %v1444
        %v1711 = vpack.c.b16 %v1452, %v1445
        %v1712 = vpack.c.b16 %v1460, %v1453
        %v1713 = vpack.c.b16 %v1461, %v1454
        %v1714 = vpack.c.b16 %v1462, %v1455
        %v1715 = vpack.c.b16 %v1463, %v1456
        %v1716 = vpack.c.b16 %v1464, %v1457
        %v1717 = vpack.c.b16 %v1465, %v1458
        %v1718 = vpack.c.b16 %v1466, %v1459
        %v1719 = vpack.c.b16 %v1474, %v1467
        %v1720 = vpack.c.b16 %v1475, %v1468
        %v1721 = vpack.c.b16 %v1476, %v1469
        %v1722 = vpack.c.b16 %v1477, %v1470
        %v1723 = vpack.c.b16 %v1478, %v1471
        %v1724 = vpack.c.b16 %v1479, %v1472
        %v1725 = vpack.c.b16 %v1480, %v1473
        %v1726 = vpack.c.b16 %v1488, %v1481
        %v1727 = vpack.c.b16 %v1489, %v1482
        %v1728 = vpack.c.b16 %v1490, %v1483
        %v1729 = vpack.c.b16 %v1491, %v1484
        %v1730 = vpack.c.b16 %v1492, %v1485
        %v1731 = vpack.c.b16 %v1493, %v1486
        %v1732 = vpack.c.b16 %v1494, %v1487
        %v1733 = vpack.c.b16 %v1502, %v1495
        %v1734 = vpack.c.b16 %v1503, %v1496
        %v1735 = vpack.c.b16 %v1504, %v1497
        %v1736 = vpack.c.b16 %v1505, %v1498
        %v1737 = vpack.c.b16 %v1506, %v1499
        %v1738 = vpack.c.b16 %v1507, %v1500
        %v1739 = vpack.c.b16 %v1508, %v1501
        %v1740 = vpack.c.b16 %v1516, %v1509
        %v1741 = vpack.c.b16 %v1517, %v1510
        %v1742 = vpack.c.b16 %v1518, %v1511
        %v1743 = vpack.c.b16 %v1519, %v1512
        %v1744 = vpack.c.b16 %v1520, %v1513
        %v1745 = vpack.c.b16 %v1521, %v1514
        %v1746 = vpack.c.b16 %v1522, %v1515
        %v1747 = vpack.c.b16 %v1530, %v1523
        %v1748 = vpack.c.b16 %v1531, %v1524
        %v1749 = vpack.c.b16 %v1532, %v1525
        %v1750 = vpack.c.b16 %v1533, %v1526
        %v1751 = vpack.c.b16 %v1534, %v1527
        %v1752 = vpack.c.b16 %v1535, %v1528
        %v1753 = vpack.c.b16 %v1536, %v1529
        %v1754 = vpack.c.b16 %v1544, %v1537
        %v1755 = vpack.c.b16 %v1545, %v1538
        %v1756 = vpack.c.b16 %v1546, %v1539
        %v1757 = vpack.c.b16 %v1547, %v1540
        %v1758 = vpack.c.b16 %v1548, %v1541
        %v1759 = vpack.c.b16 %v1549, %v1542
        %v1760 = vpack.c.b16 %v1550, %v1543
        %v1761 = vpack.c.b16 %v1558, %v1551
        %v1762 = vpack.c.b16 %v1559, %v1552
        %v1763 = vpack.c.b16 %v1560, %v1553
        %v1764 = vpack.c.b16 %v1561, %v1554
        %v1765 = vpack.c.b16 %v1562, %v1555
        %v1766 = vpack.c.b16 %v1563, %v1556
        %v1767 = vpack.c.b16 %v1564, %v1557
        %v1768 = vpack.c.b16 %v1572, %v1565
        %v1769 = vpack.c.b16 %v1573, %v1566
        %v1770 = vpack.c.b16 %v1574, %v1567
        %v1771 = vpack.c.b16 %v1575, %v1568
        %v1772 = vpack.c.b16 %v1576, %v1569
        %v1773 = vpack.c.b16 %v1577, %v1570
        %v1774 = vpack.c.b16 %v1578, %v1571
        %v1775 = vpack.c.b16 %v1586, %v1579
        %v1776 = vpack.c.b16 %v1587, %v1580
        %v1777 = vpack.c.b16 %v1588, %v1581
        %v1778 = vpack.c.b16 %v1589, %v1582
        %v1779 = vpack.c.b16 %v1590, %v1583
        %v1780 = vpack.c.b16 %v1591, %v1584
        %v1781 = vpack.c.b16 %v1592, %v1585
        %v1782 = vpack.c.b16 %v1600, %v1593
        %v1783 = vpack.c.b16 %v1601, %v1594
        %v1784 = vpack.c.b16 %v1602, %v1595
        %v1785 = vpack.c.b16 %v1603, %v1596
        %v1786 = vpack.c.b16 %v1604, %v1597
        %v1787 = vpack.c.b16 %v1605, %v1598
        %v1788 = vpack.c.b16 %v1606, %v1599
        %v1789 = vpack.c.b16 %v1614, %v1607
        %v1790 = vpack.c.b16 %v1615, %v1608
        %v1791 = vpack.c.b16 %v1616, %v1609
        %v1792 = vpack.c.b16 %v1617, %v1610
        %v1793 = vpack.c.b16 %v1618, %v1611
        %v1794 = vpack.c.b16 %v1619, %v1612
        %v1795 = vpack.c.b16 %v1620, %v1613
        %v1796 = vpack.c.b16 %v1628, %v1621
        %v1797 = vpack.c.b16 %v1629, %v1622
        %v1798 = vpack.c.b16 %v1630, %v1623
        %v1799 = vpack.c.b16 %v1631, %v1624
        %v1800 = vpack.c.b16 %v1632, %v1625
        %v1801 = vpack.c.b16 %v1633, %v1626
        %v1802 = vpack.c.b16 %v1634, %v1627
        %1971 = vmatprep.subr.bf16.mxu0 %v1636
        %1972 = vmatpush1.bf16.msra.mxu0 %v1635
        %1973 = vmatprep.subr.bf16.mxu0 %v1643
        %1974 = vmatpush1.bf16.msra.mxu0 %v1642
        %1975 = vmatprep.subr.bf16.mxu0 %v1650
        %1976 = vmatpush1.bf16.msra.mxu0 %v1649
        %1977 = vmatprep.subr.bf16.mxu0 %v1657
        %1978 = vmatpush1.bf16.msra.mxu0 %v1656
        %1979 = vmatprep.subr.bf16.mxu0 %v1664
        %1980 = vmatpush1.bf16.msra.mxu0 %v1663
        %1981 = vmatprep.subr.bf16.mxu0 %v1671
        %1982 = vmatpush1.bf16.msra.mxu0 %v1670
        %1983 = vmatprep.subr.bf16.mxu0 %v1678
        %1984 = vmatpush1.bf16.msra.mxu0 %v1677
        %1985 = vmatprep.subr.bf16.mxu0 %v1685
        %1986 = vmatpush1.bf16.msra.mxu0 %v1684
        %1987 = vmatprep.subr.bf16.mxu0 %v1692
        %1988 = vmatpush1.bf16.msra.mxu0 %v1691
        %1989 = vmatprep.subr.bf16.mxu0 %v1699
        %1990 = vmatpush1.bf16.msra.mxu0 %v1698
        %1991 = vmatprep.subr.bf16.mxu0 %v1706
        %1992 = vmatpush1.bf16.msra.mxu0 %v1705
        %1993 = vmatprep.subr.bf16.mxu0 %v1713
        %1994 = vmatpush1.bf16.msra.mxu0 %v1712
        %1995 = vmatprep.subr.bf16.mxu0 %v1720
        %1996 = vmatpush1.bf16.msra.mxu0 %v1719
        %1997 = vmatprep.subr.bf16.mxu0 %v1727
        %1998 = vmatpush1.bf16.msra.mxu0 %v1726
        %1999 = vmatprep.subr.bf16.mxu0 %v1734
        %2000 = vmatpush1.bf16.msra.mxu0 %v1733
        %2001 = vmatprep.subr.bf16.mxu0 %v1741
        %2002 = vmatpush1.bf16.msra.mxu0 %v1740
        %2003 = vmatprep.mubr.bf16.mxu0 %v820
        %2004 = vmatmul.mubr.bf16.gmra.mrb[0].mxu0 %v819
        %v2005 = vpop.f32.mrb[0].mxu0
        %v2006 = vadd.f32 0.0, %v2005
        %v2007 = vpop.f32.mrb[0].mxu0
        %v2008 = vadd.f32 0.0, %v2007
        %v2009 = vpop.f32.mrb[0].mxu0
        %v2010 = vadd.f32 0.0, %v2009
        %v2011 = vpop.f32.mrb[0].mxu0
        %v2012 = vadd.f32 0.0, %v2011
        %2013 = vmatprep.mubr.bf16.mxu0 %v823
        %2014 = vmatmul.mubr.bf16.gmra.mrb[0].mxu0 %v822
        %v2015 = vpop.f32.mrb[0].mxu0
        %v2016 = vadd.f32 0.0, %v2015
        %v2017 = vpop.f32.mrb[0].mxu0
        %v2018 = vadd.f32 0.0, %v2017
        %v2019 = vpop.f32.mrb[0].mxu0
        %v2020 = vadd.f32 0.0, %v2019
        %v2021 = vpop.f32.mrb[0].mxu0
        %v2022 = vadd.f32 0.0, %v2021
        %2023 = vmatprep.mubr.bf16.mxu0 %v826
        %2024 = vmatmul.mubr.bf16.gmra.mrb[0].mxu0 %v825
        %v2025 = vpop.f32.mrb[0].mxu0
        %v2026 = vadd.f32 0.0, %v2025
        %v2027 = vpop.f32.mrb[0].mxu0
        %v2028 = vadd.f32 0.0, %v2027
        %v2029 = vpop.f32.mrb[0].mxu0
        %v2030 = vadd.f32 0.0, %v2029
        %v2031 = vpop.f32.mrb[0].mxu0
        %v2032 = vadd.f32 0.0, %v2031
        %2033 = vmatprep.mubr.bf16.mxu0 %v829
        %2034 = vmatmul.mubr.bf16.gmra.mrb[0].mxu0 %v828
        %v2035 = vpop.f32.mrb[0].mxu0
        %v2036 = vadd.f32 0.0, %v2035
        %v2037 = vpop.f32.mrb[0].mxu0
        %v2038 = vadd.f32 0.0, %v2037
        %v2039 = vpop.f32.mrb[0].mxu0
        %v2040 = vadd.f32 0.0, %v2039
        %v2041 = vpop.f32.mrb[0].mxu0
        %v2042 = vadd.f32 0.0, %v2041
        %2043 = vdwg.mxu0
        %2044 = vmatprep.subr.bf16.mxu0 %v1748
        %2045 = vmatpush1.bf16.msra.mxu0 %v1747
        %2046 = vmatprep.subr.bf16.mxu0 %v1755
        %2047 = vmatpush1.bf16.msra.mxu0 %v1754
        %2048 = vmatprep.subr.bf16.mxu0 %v1762
        %2049 = vmatpush1.bf16.msra.mxu0 %v1761
        %2050 = vmatprep.subr.bf16.mxu0 %v1769
        %2051 = vmatpush1.bf16.msra.mxu0 %v1768
        %2052 = vmatprep.subr.bf16.mxu0 %v1776
        %2053 = vmatpush1.bf16.msra.mxu0 %v1775
        %2054 = vmatprep.subr.bf16.mxu0 %v1783
        %2055 = vmatpush1.bf16.msra.mxu0 %v1782
        %2056 = vmatprep.subr.bf16.mxu0 %v1790
        %2057 = vmatpush1.bf16.msra.mxu0 %v1789
        %2058 = vmatprep.subr.bf16.mxu0 %v1797
        %2059 = vmatpush1.bf16.msra.mxu0 %v1796
        %2060 = vmatprep.subr.bf16.mxu0 0
        %2061 = vmatpush1.bf16.msra.mxu0 0
        %2062 = vmatprep.subr.bf16.mxu0 0
        %2063 = vmatpush1.bf16.msra.mxu0 0
        %2064 = vmatprep.subr.bf16.mxu0 0
        %2065 = vmatpush1.bf16.msra.mxu0 0
        %2066 = vmatprep.subr.bf16.mxu0 0
        %2067 = vmatpush1.bf16.msra.mxu0 0
        %2068 = vmatprep.subr.bf16.mxu0 0
        %2069 = vmatpush1.bf16.msra.mxu0 0
        %2070 = vmatprep.subr.bf16.mxu0 0
        %2071 = vmatpush1.bf16.msra.mxu0 0
        %2072 = vmatprep.subr.bf16.mxu0 0
        %2073 = vmatpush1.bf16.msra.mxu0 0
        %2074 = vmatprep.subr.bf16.mxu0 0
        %2075 = vmatpush1.bf16.msra.mxu0 0
        %2076 = vmatprep.mubr.bf16.mxu0 0
        %2077 = vmatmul.mubr.bf16.gmra.mrb[0].mxu0 %v821
        %v2078 = vpop.f32.mrb[0].mxu0
        %v2079 = vadd.f32 %v2006, %v2078
        %v2080 = vpop.f32.mrb[0].mxu0
        %v2081 = vadd.f32 %v2008, %v2080
        %v2082 = vpop.f32.mrb[0].mxu0
        %v2083 = vadd.f32 %v2010, %v2082
        %v2084 = vpop.f32.mrb[0].mxu0
        %v2085 = vadd.f32 %v2012, %v2084
        %2086 = vmatprep.mubr.bf16.mxu0 0
        %2087 = vmatmul.mubr.bf16.gmra.mrb[0].mxu0 %v824
        %v2088 = vpop.f32.mrb[0].mxu0
        %v2089 = vadd.f32 %v2016, %v2088
        %v2090 = vpop.f32.mrb[0].mxu0
        %v2091 = vadd.f32 %v2018, %v2090
        %v2092 = vpop.f32.mrb[0].mxu0
        %v2093 = vadd.f32 %v2020, %v2092
        %v2094 = vpop.f32.mrb[0].mxu0
        %v2095 = vadd.f32 %v2022, %v2094
        %2096 = vmatprep.mubr.bf16.mxu0 0
        %2097 = vmatmul.mubr.bf16.gmra.mrb[0].mxu0 %v827
        %v2098 = vpop.f32.mrb[0].mxu0
        %v2099 = vadd.f32 %v2026, %v2098
        %v2100 = vpop.f32.mrb[0].mxu0
        %v2101 = vadd.f32 %v2028, %v2100
        %v2102 = vpop.f32.mrb[0].mxu0
        %v2103 = vadd.f32 %v2030, %v2102
        %v2104 = vpop.f32.mrb[0].mxu0
        %v2105 = vadd.f32 %v2032, %v2104
        %2106 = vmatprep.mubr.bf16.mxu0 0
        %2107 = vmatmul.mubr.bf16.gmra.mrb[0].mxu0 %v830
        %v2108 = vpop.f32.mrb[0].mxu0
        %v2109 = vadd.f32 %v2036, %v2108
        %v2110 = vpop.f32.mrb[0].mxu0
        %v2111 = vadd.f32 %v2038, %v2110
        %v2112 = vpop.f32.mrb[0].mxu0
        %v2113 = vadd.f32 %v2040, %v2112
        %v2114 = vpop.f32.mrb[0].mxu0
        %v2115 = vadd.f32 %v2042, %v2114
        %2116 = vdwg.mxu0
        %2117 = vmatprep.subr.bf16.mxu0 %v1638
        %2118 = vmatpush1.bf16.msra.mxu0 %v1637
        %2119 = vmatprep.subr.bf16.mxu0 %v1645
        %2120 = vmatpush1.bf16.msra.mxu0 %v1644
        %2121 = vmatprep.subr.bf16.mxu0 %v1652
        %2122 = vmatpush1.bf16.msra.mxu0 %v1651
        %2123 = vmatprep.subr.bf16.mxu0 %v1659
        %2124 = vmatpush1.bf16.msra.mxu0 %v1658
        %2125 = vmatprep.subr.bf16.mxu0 %v1666
        %2126 = vmatpush1.bf16.msra.mxu0 %v1665
        %2127 = vmatprep.subr.bf16.mxu0 %v1673
        %2128 = vmatpush1.bf16.msra.mxu0 %v1672
        %2129 = vmatprep.subr.bf16.mxu0 %v1680
        %2130 = vmatpush1.bf16.msra.mxu0 %v1679
        %2131 = vmatprep.subr.bf16.mxu0 %v1687
        %2132 = vmatpush1.bf16.msra.mxu0 %v1686
        %2133 = vmatprep.subr.bf16.mxu0 %v1694
        %2134 = vmatpush1.bf16.msra.mxu0 %v1693
        %2135 = vmatprep.subr.bf16.mxu0 %v1701
        %2136 = vmatpush1.bf16.msra.mxu0 %v1700
        %2137 = vmatprep.subr.bf16.mxu0 %v1708
        %2138 = vmatpush1.bf16.msra.mxu0 %v1707
        %2139 = vmatprep.subr.bf16.mxu0 %v1715
        %2140 = vmatpush1.bf16.msra.mxu0 %v1714
        %2141 = vmatprep.subr.bf16.mxu0 %v1722
        %2142 = vmatpush1.bf16.msra.mxu0 %v1721
        %2143 = vmatprep.subr.bf16.mxu0 %v1729
        %2144 = vmatpush1.bf16.msra.mxu0 %v1728
        %2145 = vmatprep.subr.bf16.mxu0 %v1736
        %2146 = vmatpush1.bf16.msra.mxu0 %v1735
        %2147 = vmatprep.subr.bf16.mxu0 %v1743
        %2148 = vmatpush1.bf16.msra.mxu0 %v1742
        %2149 = vmatprep.mubr.bf16.mxu0 %v820
        %2150 = vmatmul.mubr.bf16.gmra.mrb[0].mxu0 %v819
        %v2151 = vpop.f32.mrb[0].mxu0
        %v2152 = vadd.f32 0.0, %v2151
        %v2153 = vpop.f32.mrb[0].mxu0
        %v2154 = vadd.f32 0.0, %v2153
        %v2155 = vpop.f32.mrb[0].mxu0
        %v2156 = vadd.f32 0.0, %v2155
        %v2157 = vpop.f32.mrb[0].mxu0
        %v2158 = vadd.f32 0.0, %v2157
        %2159 = vmatprep.mubr.bf16.mxu0 %v823
        %2160 = vmatmul.mubr.bf16.gmra.mrb[0].mxu0 %v822
        %v2161 = vpop.f32.mrb[0].mxu0
        %v2162 = vadd.f32 0.0, %v2161
        %v2163 = vpop.f32.mrb[0].mxu0
        %v2164 = vadd.f32 0.0, %v2163
        %v2165 = vpop.f32.mrb[0].mxu0
        %v2166 = vadd.f32 0.0, %v2165
        %v2167 = vpop.f32.mrb[0].mxu0
        %v2168 = vadd.f32 0.0, %v2167
        %2169 = vmatprep.mubr.bf16.mxu0 %v826
        %2170 = vmatmul.mubr.bf16.gmra.mrb[0].mxu0 %v825
        %v2171 = vpop.f32.mrb[0].mxu0
        %v2172 = vadd.f32 0.0, %v2171
        %v2173 = vpop.f32.mrb[0].mxu0
        %v2174 = vadd.f32 0.0, %v2173
        %v2175 = vpop.f32.mrb[0].mxu0
        %v2176 = vadd.f32 0.0, %v2175
        %v2177 = vpop.f32.mrb[0].mxu0
        %v2178 = vadd.f32 0.0, %v2177
        %2179 = vmatprep.mubr.bf16.mxu0 %v829
        %2180 = vmatmul.mubr.bf16.gmra.mrb[0].mxu0 %v828
        %v2181 = vpop.f32.mrb[0].mxu0
        %v2182 = vadd.f32 0.0, %v2181
        %v2183 = vpop.f32.mrb[0].mxu0
        %v2184 = vadd.f32 0.0, %v2183
        %v2185 = vpop.f32.mrb[0].mxu0
        %v2186 = vadd.f32 0.0, %v2185
        %v2187 = vpop.f32.mrb[0].mxu0
        %v2188 = vadd.f32 0.0, %v2187
        %2189 = vdwg.mxu0
        %2190 = vmatprep.subr.bf16.mxu0 %v1750
        %2191 = vmatpush1.bf16.msra.mxu0 %v1749
        %2192 = vmatprep.subr.bf16.mxu0 %v1757
        %2193 = vmatpush1.bf16.msra.mxu0 %v1756
        %2194 = vmatprep.subr.bf16.mxu0 %v1764
        %2195 = vmatpush1.bf16.msra.mxu0 %v1763
        %2196 = vmatprep.subr.bf16.mxu0 %v1771
        %2197 = vmatpush1.bf16.msra.mxu0 %v1770
        %2198 = vmatprep.subr.bf16.mxu0 %v1778
        %2199 = vmatpush1.bf16.msra.mxu0 %v1777
        %2200 = vmatprep.subr.bf16.mxu0 %v1785
        %2201 = vmatpush1.bf16.msra.mxu0 %v1784
        %2202 = vmatprep.subr.bf16.mxu0 %v1792
        %2203 = vmatpush1.bf16.msra.mxu0 %v1791
        %2204 = vmatprep.subr.bf16.mxu0 %v1799
        %2205 = vmatpush1.bf16.msra.mxu0 %v1798
        %2206 = vmatprep.subr.bf16.mxu0 0
        %2207 = vmatpush1.bf16.msra.mxu0 0
        %2208 = vmatprep.subr.bf16.mxu0 0
        %2209 = vmatpush1.bf16.msra.mxu0 0
        %2210 = vmatprep.subr.bf16.mxu0 0
        %2211 = vmatpush1.bf16.msra.mxu0 0
        %2212 = vmatprep.subr.bf16.mxu0 0
        %2213 = vmatpush1.bf16.msra.mxu0 0
        %2214 = vmatprep.subr.bf16.mxu0 0
        %2215 = vmatpush1.bf16.msra.mxu0 0
        %2216 = vmatprep.subr.bf16.mxu0 0
        %2217 = vmatpush1.bf16.msra.mxu0 0
        %2218 = vmatprep.subr.bf16.mxu0 0
        %2219 = vmatpush1.bf16.msra.mxu0 0
        %2220 = vmatprep.subr.bf16.mxu0 0
        %2221 = vmatpush1.bf16.msra.mxu0 0
        %2222 = vmatprep.mubr.bf16.mxu0 0
        %2223 = vmatmul.mubr.bf16.gmra.mrb[0].mxu0 %v821
        %v2224 = vpop.f32.mrb[0].mxu0
        %v2225 = vadd.f32 %v2152, %v2224
        %v2226 = vpop.f32.mrb[0].mxu0
        %v2227 = vadd.f32 %v2154, %v2226
        %v2228 = vpop.f32.mrb[0].mxu0
        %v2229 = vadd.f32 %v2156, %v2228
        %v2230 = vpop.f32.mrb[0].mxu0
        %v2231 = vadd.f32 %v2158, %v2230
        %2232 = vmatprep.mubr.bf16.mxu0 0
        %2233 = vmatmul.mubr.bf16.gmra.mrb[0].mxu0 %v824
        %v2234 = vpop.f32.mrb[0].mxu0
        %v2235 = vadd.f32 %v2162, %v2234
        %v2236 = vpop.f32.mrb[0].mxu0
        %v2237 = vadd.f32 %v2164, %v2236
        %v2238 = vpop.f32.mrb[0].mxu0
        %v2239 = vadd.f32 %v2166, %v2238
        %v2240 = vpop.f32.mrb[0].mxu0
        %v2241 = vadd.f32 %v2168, %v2240
        %2242 = vmatprep.mubr.bf16.mxu0 0
        %2243 = vmatmul.mubr.bf16.gmra.mrb[0].mxu0 %v827
        %v2244 = vpop.f32.mrb[0].mxu0
        %v2245 = vadd.f32 %v2172, %v2244
        %v2246 = vpop.f32.mrb[0].mxu0
        %v2247 = vadd.f32 %v2174, %v2246
        %v2248 = vpop.f32.mrb[0].mxu0
        %v2249 = vadd.f32 %v2176, %v2248
        %v2250 = vpop.f32.mrb[0].mxu0
        %v2251 = vadd.f32 %v2178, %v2250
        %2252 = vmatprep.mubr.bf16.mxu0 0
        %2253 = vmatmul.mubr.bf16.gmra.mrb[0].mxu0 %v830
        %v2254 = vpop.f32.mrb[0].mxu0
        %v2255 = vadd.f32 %v2182, %v2254
        %v2256 = vpop.f32.mrb[0].mxu0
        %v2257 = vadd.f32 %v2184, %v2256
        %v2258 = vpop.f32.mrb[0].mxu0
        %v2259 = vadd.f32 %v2186, %v2258
        %v2260 = vpop.f32.mrb[0].mxu0
        %v2261 = vadd.f32 %v2188, %v2260
        %2262 = vdwg.mxu0
        %2263 = vmatprep.subr.bf16.mxu0 %v1640
        %2264 = vmatpush1.bf16.msra.mxu0 %v1639
        %2265 = vmatprep.subr.bf16.mxu0 %v1647
        %2266 = vmatpush1.bf16.msra.mxu0 %v1646
        %2267 = vmatprep.subr.bf16.mxu0 %v1654
        %2268 = vmatpush1.bf16.msra.mxu0 %v1653
        %2269 = vmatprep.subr.bf16.mxu0 %v1661
        %2270 = vmatpush1.bf16.msra.mxu0 %v1660
        %2271 = vmatprep.subr.bf16.mxu0 %v1668
        %2272 = vmatpush1.bf16.msra.mxu0 %v1667
        %2273 = vmatprep.subr.bf16.mxu0 %v1675
        %2274 = vmatpush1.bf16.msra.mxu0 %v1674
        %2275 = vmatprep.subr.bf16.mxu0 %v1682
        %2276 = vmatpush1.bf16.msra.mxu0 %v1681
        %2277 = vmatprep.subr.bf16.mxu0 %v1689
        %2278 = vmatpush1.bf16.msra.mxu0 %v1688
        %2279 = vmatprep.subr.bf16.mxu0 %v1696
        %2280 = vmatpush1.bf16.msra.mxu0 %v1695
        %2281 = vmatprep.subr.bf16.mxu0 %v1703
        %2282 = vmatpush1.bf16.msra.mxu0 %v1702
        %2283 = vmatprep.subr.bf16.mxu0 %v1710
        %2284 = vmatpush1.bf16.msra.mxu0 %v1709
        %2285 = vmatprep.subr.bf16.mxu0 %v1717
        %2286 = vmatpush1.bf16.msra.mxu0 %v1716
        %2287 = vmatprep.subr.bf16.mxu0 %v1724
        %2288 = vmatpush1.bf16.msra.mxu0 %v1723
        %2289 = vmatprep.subr.bf16.mxu0 %v1731
        %2290 = vmatpush1.bf16.msra.mxu0 %v1730
        %2291 = vmatprep.subr.bf16.mxu0 %v1738
        %2292 = vmatpush1.bf16.msra.mxu0 %v1737
        %2293 = vmatprep.subr.bf16.mxu0 %v1745
        %2294 = vmatpush1.bf16.msra.mxu0 %v1744
        %2295 = vmatprep.mubr.bf16.mxu0 %v820
        %2296 = vmatmul.mubr.bf16.gmra.mrb[0].mxu0 %v819
        %v2297 = vpop.f32.mrb[0].mxu0
        %v2298 = vadd.f32 0.0, %v2297
        %v2299 = vpop.f32.mrb[0].mxu0
        %v2300 = vadd.f32 0.0, %v2299
        %v2301 = vpop.f32.mrb[0].mxu0
        %v2302 = vadd.f32 0.0, %v2301
        %v2303 = vpop.f32.mrb[0].mxu0
        %v2304 = vadd.f32 0.0, %v2303
        %2305 = vmatprep.mubr.bf16.mxu0 %v823
        %2306 = vmatmul.mubr.bf16.gmra.mrb[0].mxu0 %v822
        %v2307 = vpop.f32.mrb[0].mxu0
        %v2308 = vadd.f32 0.0, %v2307
        %v2309 = vpop.f32.mrb[0].mxu0
        %v2310 = vadd.f32 0.0, %v2309
        %v2311 = vpop.f32.mrb[0].mxu0
        %v2312 = vadd.f32 0.0, %v2311
        %v2313 = vpop.f32.mrb[0].mxu0
        %v2314 = vadd.f32 0.0, %v2313
        %2315 = vmatprep.mubr.bf16.mxu0 %v826
        %2316 = vmatmul.mubr.bf16.gmra.mrb[0].mxu0 %v825
        %v2317 = vpop.f32.mrb[0].mxu0
        %v2318 = vadd.f32 0.0, %v2317
        %v2319 = vpop.f32.mrb[0].mxu0
        %v2320 = vadd.f32 0.0, %v2319
        %v2321 = vpop.f32.mrb[0].mxu0
        %v2322 = vadd.f32 0.0, %v2321
        %v2323 = vpop.f32.mrb[0].mxu0
        %v2324 = vadd.f32 0.0, %v2323
        %2325 = vmatprep.mubr.bf16.mxu0 %v829
        %2326 = vmatmul.mubr.bf16.gmra.mrb[0].mxu0 %v828
        %v2327 = vpop.f32.mrb[0].mxu0
        %v2328 = vadd.f32 0.0, %v2327
        %v2329 = vpop.f32.mrb[0].mxu0
        %v2330 = vadd.f32 0.0, %v2329
        %v2331 = vpop.f32.mrb[0].mxu0
        %v2332 = vadd.f32 0.0, %v2331
        %v2333 = vpop.f32.mrb[0].mxu0
        %v2334 = vadd.f32 0.0, %v2333
        %2335 = vdwg.mxu0
        %2336 = vmatprep.subr.bf16.mxu0 %v1752
        %2337 = vmatpush1.bf16.msra.mxu0 %v1751
        %2338 = vmatprep.subr.bf16.mxu0 %v1759
        %2339 = vmatpush1.bf16.msra.mxu0 %v1758
        %2340 = vmatprep.subr.bf16.mxu0 %v1766
        %2341 = vmatpush1.bf16.msra.mxu0 %v1765
        %2342 = vmatprep.subr.bf16.mxu0 %v1773
        %2343 = vmatpush1.bf16.msra.mxu0 %v1772
        %2344 = vmatprep.subr.bf16.mxu0 %v1780
        %2345 = vmatpush1.bf16.msra.mxu0 %v1779
        %2346 = vmatprep.subr.bf16.mxu0 %v1787
        %2347 = vmatpush1.bf16.msra.mxu0 %v1786
        %2348 = vmatprep.subr.bf16.mxu0 %v1794
        %2349 = vmatpush1.bf16.msra.mxu0 %v1793
        %2350 = vmatprep.subr.bf16.mxu0 %v1801
        %2351 = vmatpush1.bf16.msra.mxu0 %v1800
        %2352 = vmatprep.subr.bf16.mxu0 0
        %2353 = vmatpush1.bf16.msra.mxu0 0
        %2354 = vmatprep.subr.bf16.mxu0 0
        %2355 = vmatpush1.bf16.msra.mxu0 0
        %2356 = vmatprep.subr.bf16.mxu0 0
        %2357 = vmatpush1.bf16.msra.mxu0 0
        %2358 = vmatprep.subr.bf16.mxu0 0
        %2359 = vmatpush1.bf16.msra.mxu0 0
        %2360 = vmatprep.subr.bf16.mxu0 0
        %2361 = vmatpush1.bf16.msra.mxu0 0
        %2362 = vmatprep.subr.bf16.mxu0 0
        %2363 = vmatpush1.bf16.msra.mxu0 0
        %2364 = vmatprep.subr.bf16.mxu0 0
        %2365 = vmatpush1.bf16.msra.mxu0 0
        %2366 = vmatprep.subr.bf16.mxu0 0
        %2367 = vmatpush1.bf16.msra.mxu0 0
        %2368 = vmatprep.mubr.bf16.mxu0 0
        %2369 = vmatmul.mubr.bf16.gmra.mrb[0].mxu0 %v821
        %v2370 = vpop.f32.mrb[0].mxu0
        %v2371 = vadd.f32 %v2298, %v2370
        %v2372 = vpop.f32.mrb[0].mxu0
        %v2373 = vadd.f32 %v2300, %v2372
        %v2374 = vpop.f32.mrb[0].mxu0
        %v2375 = vadd.f32 %v2302, %v2374
        %v2376 = vpop.f32.mrb[0].mxu0
        %v2377 = vadd.f32 %v2304, %v2376
        %2378 = vmatprep.mubr.bf16.mxu0 0
        %2379 = vmatmul.mubr.bf16.gmra.mrb[0].mxu0 %v824
        %v2380 = vpop.f32.mrb[0].mxu0
        %v2381 = vadd.f32 %v2308, %v2380
        %v2382 = vpop.f32.mrb[0].mxu0
        %v2383 = vadd.f32 %v2310, %v2382
        %v2384 = vpop.f32.mrb[0].mxu0
        %v2385 = vadd.f32 %v2312, %v2384
        %v2386 = vpop.f32.mrb[0].mxu0
        %v2387 = vadd.f32 %v2314, %v2386
        %2388 = vmatprep.mubr.bf16.mxu0 0
        %2389 = vmatmul.mubr.bf16.gmra.mrb[0].mxu0 %v827
        %v2390 = vpop.f32.mrb[0].mxu0
        %v2391 = vadd.f32 %v2318, %v2390
        %v2392 = vpop.f32.mrb[0].mxu0
        %v2393 = vadd.f32 %v2320, %v2392
        %v2394 = vpop.f32.mrb[0].mxu0
        %v2395 = vadd.f32 %v2322, %v2394
        %v2396 = vpop.f32.mrb[0].mxu0
        %v2397 = vadd.f32 %v2324, %v2396
        %2398 = vmatprep.mubr.bf16.mxu0 0
        %2399 = vmatmul.mubr.bf16.gmra.mrb[0].mxu0 %v830
        %v2400 = vpop.f32.mrb[0].mxu0
        %v2401 = vadd.f32 %v2328, %v2400
        %v2402 = vpop.f32.mrb[0].mxu0
        %v2403 = vadd.f32 %v2330, %v2402
        %v2404 = vpop.f32.mrb[0].mxu0
        %v2405 = vadd.f32 %v2332, %v2404
        %v2406 = vpop.f32.mrb[0].mxu0
        %v2407 = vadd.f32 %v2334, %v2406
        %2408 = vdwg.mxu0
        %2409 = vmatprep.subr.bf16.mxu0 0
        %2410 = vmatpush1.bf16.msra.mxu0 %v1641
        %2411 = vmatprep.subr.bf16.mxu0 0
        %2412 = vmatpush1.bf16.msra.mxu0 %v1648
        %2413 = vmatprep.subr.bf16.mxu0 0
        %2414 = vmatpush1.bf16.msra.mxu0 %v1655
        %2415 = vmatprep.subr.bf16.mxu0 0
        %2416 = vmatpush1.bf16.msra.mxu0 %v1662
        %2417 = vmatprep.subr.bf16.mxu0 0
        %2418 = vmatpush1.bf16.msra.mxu0 %v1669
        %2419 = vmatprep.subr.bf16.mxu0 0
        %2420 = vmatpush1.bf16.msra.mxu0 %v1676
        %2421 = vmatprep.subr.bf16.mxu0 0
        %2422 = vmatpush1.bf16.msra.mxu0 %v1683
        %2423 = vmatprep.subr.bf16.mxu0 0
        %2424 = vmatpush1.bf16.msra.mxu0 %v1690
        %2425 = vmatprep.subr.bf16.mxu0 0
        %2426 = vmatpush1.bf16.msra.mxu0 %v1697
        %2427 = vmatprep.subr.bf16.mxu0 0
        %2428 = vmatpush1.bf16.msra.mxu0 %v1704
        %2429 = vmatprep.subr.bf16.mxu0 0
        %2430 = vmatpush1.bf16.msra.mxu0 %v1711
        %2431 = vmatprep.subr.bf16.mxu0 0
        %2432 = vmatpush1.bf16.msra.mxu0 %v1718
        %2433 = vmatprep.subr.bf16.mxu0 0
        %2434 = vmatpush1.bf16.msra.mxu0 %v1725
        %2435 = vmatprep.subr.bf16.mxu0 0
        %2436 = vmatpush1.bf16.msra.mxu0 %v1732
        %2437 = vmatprep.subr.bf16.mxu0 0
        %2438 = vmatpush1.bf16.msra.mxu0 %v1739
        %2439 = vmatprep.subr.bf16.mxu0 0
        %2440 = vmatpush1.bf16.msra.mxu0 %v1746
        %2441 = vmatprep.mubr.bf16.mxu0 %v820
        %2442 = vmatmul.mubr.bf16.gmra.mrb[0].mxu0 %v819
        %v2443 = vpop.f32.mrb[0].mxu0
        %v2444 = vadd.f32 0.0, %v2443
        %v2445 = vpop.f32.mrb[0].mxu0
        %v2446 = vpop.f32.mrb[0].mxu0
        %v2447 = vadd.f32 0.0, %v2446
        %v2448 = vpop.f32.mrb[0].mxu0
        %2449 = vmatprep.mubr.bf16.mxu0 %v823
        %2450 = vmatmul.mubr.bf16.gmra.mrb[0].mxu0 %v822
        %v2451 = vpop.f32.mrb[0].mxu0
        %v2452 = vadd.f32 0.0, %v2451
        %v2453 = vpop.f32.mrb[0].mxu0
        %v2454 = vpop.f32.mrb[0].mxu0
        %v2455 = vadd.f32 0.0, %v2454
        %v2456 = vpop.f32.mrb[0].mxu0
        %2457 = vmatprep.mubr.bf16.mxu0 %v826
        %2458 = vmatmul.mubr.bf16.gmra.mrb[0].mxu0 %v825
        %v2459 = vpop.f32.mrb[0].mxu0
        %v2460 = vadd.f32 0.0, %v2459
        %v2461 = vpop.f32.mrb[0].mxu0
        %v2462 = vpop.f32.mrb[0].mxu0
        %v2463 = vadd.f32 0.0, %v2462
        %v2464 = vpop.f32.mrb[0].mxu0
        %2465 = vmatprep.mubr.bf16.mxu0 %v829
        %2466 = vmatmul.mubr.bf16.gmra.mrb[0].mxu0 %v828
        %v2467 = vpop.f32.mrb[0].mxu0
        %v2468 = vadd.f32 0.0, %v2467
        %v2469 = vpop.f32.mrb[0].mxu0
        %v2470 = vpop.f32.mrb[0].mxu0
        %v2471 = vadd.f32 0.0, %v2470
        %v2472 = vpop.f32.mrb[0].mxu0
        %2473 = vdwg.mxu0
        %2474 = vmatprep.subr.bf16.mxu0 0
        %2475 = vmatpush1.bf16.msra.mxu0 %v1753
        %2476 = vmatprep.subr.bf16.mxu0 0
        %2477 = vmatpush1.bf16.msra.mxu0 %v1760
        %2478 = vmatprep.subr.bf16.mxu0 0
        %2479 = vmatpush1.bf16.msra.mxu0 %v1767
        %2480 = vmatprep.subr.bf16.mxu0 0
        %2481 = vmatpush1.bf16.msra.mxu0 %v1774
        %2482 = vmatprep.subr.bf16.mxu0 0
        %2483 = vmatpush1.bf16.msra.mxu0 %v1781
        %2484 = vmatprep.subr.bf16.mxu0 0
        %2485 = vmatpush1.bf16.msra.mxu0 %v1788
        %2486 = vmatprep.subr.bf16.mxu0 0
        %2487 = vmatpush1.bf16.msra.mxu0 %v1795
        %2488 = vmatprep.subr.bf16.mxu0 0
        %2489 = vmatpush1.bf16.msra.mxu0 %v1802
        %2490 = vmatprep.subr.bf16.mxu0 0
        %2491 = vmatpush1.bf16.msra.mxu0 0
        %2492 = vmatprep.subr.bf16.mxu0 0
        %2493 = vmatpush1.bf16.msra.mxu0 0
        %2494 = vmatprep.subr.bf16.mxu0 0
        %2495 = vmatpush1.bf16.msra.mxu0 0
        %2496 = vmatprep.subr.bf16.mxu0 0
        %2497 = vmatpush1.bf16.msra.mxu0 0
        %2498 = vmatprep.subr.bf16.mxu0 0
        %2499 = vmatpush1.bf16.msra.mxu0 0
        %2500 = vmatprep.subr.bf16.mxu0 0
        %2501 = vmatpush1.bf16.msra.mxu0 0
        %2502 = vmatprep.subr.bf16.mxu0 0
        %2503 = vmatpush1.bf16.msra.mxu0 0
        %2504 = vmatprep.subr.bf16.mxu0 0
        %2505 = vmatpush1.bf16.msra.mxu0 0
        %2506 = vmatprep.mubr.bf16.mxu0 0
        %2507 = vmatmul.mubr.bf16.gmra.mrb[0].mxu0 %v821
        %v2508 = vpop.f32.mrb[0].mxu0
        %v2509 = vadd.f32 %v2444, %v2508
        %v2510 = vpop.f32.mrb[0].mxu0
        %v2511 = vpop.f32.mrb[0].mxu0
        %v2512 = vadd.f32 %v2447, %v2511
        %v2513 = vpop.f32.mrb[0].mxu0
        %2514 = vmatprep.mubr.bf16.mxu0 0
        %2515 = vmatmul.mubr.bf16.gmra.mrb[0].mxu0 %v824
        %v2516 = vpop.f32.mrb[0].mxu0
        %v2517 = vadd.f32 %v2452, %v2516
        %v2518 = vpop.f32.mrb[0].mxu0
        %v2519 = vpop.f32.mrb[0].mxu0
        %v2520 = vadd.f32 %v2455, %v2519
        %v2521 = vpop.f32.mrb[0].mxu0
        %2522 = vmatprep.mubr.bf16.mxu0 0
        %2523 = vmatmul.mubr.bf16.gmra.mrb[0].mxu0 %v827
        %v2524 = vpop.f32.mrb[0].mxu0
        %v2525 = vadd.f32 %v2460, %v2524
        %v2526 = vpop.f32.mrb[0].mxu0
        %v2527 = vpop.f32.mrb[0].mxu0
        %v2528 = vadd.f32 %v2463, %v2527
        %v2529 = vpop.f32.mrb[0].mxu0
        %2530 = vmatprep.mubr.bf16.mxu0 0
        %2531 = vmatmul.mubr.bf16.gmra.mrb[0].mxu0 %v830
        %v2532 = vpop.f32.mrb[0].mxu0
        %v2533 = vadd.f32 %v2468, %v2532
        %v2534 = vpop.f32.mrb[0].mxu0
        %v2535 = vpop.f32.mrb[0].mxu0
        %v2536 = vadd.f32 %v2471, %v2535
        %v2537 = vpop.f32.mrb[0].mxu0
        %2538 = vdwg.mxu0
        %v2539 = vld [vmem:[%s4] sm:$0x3f]
        %v2541 = vlaneseq
        %v2542 = vshrl.u32 %v2541, 7
        %v2543 = vsub.s32 0, %v2542
        %v2544 = vrot.slane %v2539, %v2543
        %v2545 = vlaneseq
        %v2546 = vshrl.u32 %v2545, 7
        %v2547 = vsub.s32 1, %v2546
        %v2548 = vrot.slane %v2539, %v2547
        %v2549 = vlaneseq
        %v2550 = vshrl.u32 %v2549, 7
        %v2551 = vsub.s32 2, %v2550
        %v2552 = vrot.slane %v2539, %v2551
        %v2553 = vlaneseq
        %v2554 = vshrl.u32 %v2553, 7
        %v2555 = vsub.s32 3, %v2554
        %v2556 = vrot.slane %v2539, %v2555
        %v2557 = vlaneseq
        %v2558 = vshrl.u32 %v2557, 7
        %v2559 = vsub.s32 4, %v2558
        %v2560 = vrot.slane %v2539, %v2559
        %v2561 = vlaneseq
        %v2562 = vshrl.u32 %v2561, 7
        %v2563 = vsub.s32 5, %v2562
        %v2564 = vrot.slane %v2539, %v2563
        %v2571 = vadd.f32 %v2079, %v2544
        %v2572 = vadd.f32 %v2081, %v2548
        %v2573 = vadd.f32 %v2225, %v2552
        %v2574 = vadd.f32 %v2227, %v2556
        %v2575 = vadd.f32 %v2371, %v2560
        %v2576 = vadd.f32 %v2373, %v2564
        %v2577 = vadd.f32 %v2083, %v2544
        %v2578 = vadd.f32 %v2085, %v2548
        %v2579 = vadd.f32 %v2229, %v2552
        %v2580 = vadd.f32 %v2231, %v2556
        %v2581 = vadd.f32 %v2375, %v2560
        %v2582 = vadd.f32 %v2377, %v2564
        %v2583 = vadd.f32 %v2089, %v2544
        %v2584 = vadd.f32 %v2091, %v2548
        %v2585 = vadd.f32 %v2235, %v2552
        %v2586 = vadd.f32 %v2237, %v2556
        %v2587 = vadd.f32 %v2381, %v2560
        %v2588 = vadd.f32 %v2383, %v2564
        %v2589 = vadd.f32 %v2093, %v2544
        %v2590 = vadd.f32 %v2095, %v2548
        %v2591 = vadd.f32 %v2239, %v2552
        %v2592 = vadd.f32 %v2241, %v2556
        %v2593 = vadd.f32 %v2385, %v2560
        %v2594 = vadd.f32 %v2387, %v2564
        %v2595 = vadd.f32 %v2099, %v2544
        %v2596 = vadd.f32 %v2101, %v2548
        %v2597 = vadd.f32 %v2245, %v2552
        %v2598 = vadd.f32 %v2247, %v2556
        %v2599 = vadd.f32 %v2391, %v2560
        %v2600 = vadd.f32 %v2393, %v2564
        %v2601 = vadd.f32 %v2103, %v2544
        %v2602 = vadd.f32 %v2105, %v2548
        %v2603 = vadd.f32 %v2249, %v2552
        %v2604 = vadd.f32 %v2251, %v2556
        %v2605 = vadd.f32 %v2395, %v2560
        %v2606 = vadd.f32 %v2397, %v2564
        %v2607 = vadd.f32 %v2109, %v2544
        %v2608 = vadd.f32 %v2111, %v2548
        %v2609 = vadd.f32 %v2255, %v2552
        %v2610 = vadd.f32 %v2257, %v2556
        %v2611 = vadd.f32 %v2401, %v2560
        %v2612 = vadd.f32 %v2403, %v2564
        %v2613 = vadd.f32 %v2113, %v2544
        %v2614 = vadd.f32 %v2115, %v2548
        %v2615 = vadd.f32 %v2259, %v2552
        %v2616 = vadd.f32 %v2261, %v2556
        %v2617 = vadd.f32 %v2405, %v2560
        %v2618 = vadd.f32 %v2407, %v2564
        %v2619 = vmax.f32 %v2571, 0.0
        %v2620 = vmax.f32 %v2572, 0.0
        %v2621 = vmax.f32 %v2573, 0.0
        %v2622 = vmax.f32 %v2574, 0.0
        %v2623 = vmax.f32 %v2575, 0.0
        %v2624 = vmax.f32 %v2576, 0.0
        %v2625 = vmax.f32 %v2577, 0.0
        %v2626 = vmax.f32 %v2578, 0.0
        %v2627 = vmax.f32 %v2579, 0.0
        %v2628 = vmax.f32 %v2580, 0.0
        %v2629 = vmax.f32 %v2581, 0.0
        %v2630 = vmax.f32 %v2582, 0.0
        %v2631 = vmax.f32 %v2583, 0.0
        %v2632 = vmax.f32 %v2584, 0.0
        %v2633 = vmax.f32 %v2585, 0.0
        %v2634 = vmax.f32 %v2586, 0.0
        %v2635 = vmax.f32 %v2587, 0.0
        %v2636 = vmax.f32 %v2588, 0.0
        %v2637 = vmax.f32 %v2589, 0.0
        %v2638 = vmax.f32 %v2590, 0.0
        %v2639 = vmax.f32 %v2591, 0.0
        %v2640 = vmax.f32 %v2592, 0.0
        %v2641 = vmax.f32 %v2593, 0.0
        %v2642 = vmax.f32 %v2594, 0.0
        %v2643 = vmax.f32 %v2595, 0.0
        %v2644 = vmax.f32 %v2596, 0.0
        %v2645 = vmax.f32 %v2597, 0.0
        %v2646 = vmax.f32 %v2598, 0.0
        %v2647 = vmax.f32 %v2599, 0.0
        %v2648 = vmax.f32 %v2600, 0.0
        %v2649 = vmax.f32 %v2601, 0.0
        %v2650 = vmax.f32 %v2602, 0.0
        %v2651 = vmax.f32 %v2603, 0.0
        %v2652 = vmax.f32 %v2604, 0.0
        %v2653 = vmax.f32 %v2605, 0.0
        %v2654 = vmax.f32 %v2606, 0.0
        %v2655 = vmax.f32 %v2607, 0.0
        %v2656 = vmax.f32 %v2608, 0.0
        %v2657 = vmax.f32 %v2609, 0.0
        %v2658 = vmax.f32 %v2610, 0.0
        %v2659 = vmax.f32 %v2611, 0.0
        %v2660 = vmax.f32 %v2612, 0.0
        %v2661 = vmax.f32 %v2613, 0.0
        %v2662 = vmax.f32 %v2614, 0.0
        %v2663 = vmax.f32 %v2615, 0.0
        %v2664 = vmax.f32 %v2616, 0.0
        %v2665 = vmax.f32 %v2617, 0.0
        %v2666 = vmax.f32 %v2618, 0.0
        %v2667 = vpack.c.bf16 %v2625, %v2619
        %v2668 = vpack.c.bf16 %v2626, %v2620
        %v2669 = vpack.c.bf16 %v2627, %v2621
        %v2670 = vpack.c.bf16 %v2628, %v2622
        %v2671 = vpack.c.bf16 %v2629, %v2623
        %v2672 = vpack.c.bf16 %v2630, %v2624
        %v2673 = vpack.c.bf16 %v2637, %v2631
        %v2674 = vpack.c.bf16 %v2638, %v2632
        %v2675 = vpack.c.bf16 %v2639, %v2633
        %v2676 = vpack.c.bf16 %v2640, %v2634
        %v2677 = vpack.c.bf16 %v2641, %v2635
        %v2678 = vpack.c.bf16 %v2642, %v2636
        %v2679 = vpack.c.bf16 %v2649, %v2643
        %v2680 = vpack.c.bf16 %v2650, %v2644
        %v2681 = vpack.c.bf16 %v2651, %v2645
        %v2682 = vpack.c.bf16 %v2652, %v2646
        %v2683 = vpack.c.bf16 %v2653, %v2647
        %v2684 = vpack.c.bf16 %v2654, %v2648
        %v2685 = vpack.c.bf16 %v2661, %v2655
        %v2686 = vpack.c.bf16 %v2662, %v2656
        %v2687 = vpack.c.bf16 %v2663, %v2657
        %v2688 = vpack.c.bf16 %v2664, %v2658
        %v2689 = vpack.c.bf16 %v2665, %v2659
        %v2690 = vpack.c.bf16 %v2666, %v2660
        %v2691 = vld [vmem:[#allocation7] sm:$0xf]
        %v2692 = vld [vmem:[#allocation7 + $0x4] sm:$0xf]
        %v2693 = vld [vmem:[#allocation7 + $0x8] sm:$0xf]
        %v2694 = vld [vmem:[#allocation7 + $0xc] sm:$0xf]
        %v2695 = vld [vmem:[#allocation7 + $0x10] sm:$0xf]
        %v2696 = vld [vmem:[#allocation7 + $0x14] sm:$0xf]
        %v2697 = vld [vmem:[#allocation7 + $0x18] sm:$0xf]
        %v2698 = vld [vmem:[#allocation7 + $0x1c] sm:$0xf]
        %v2699 = vld [vmem:[#allocation7 + $0x20] sm:$0xf]
        %v2700 = vld [vmem:[#allocation7 + $0x24] sm:$0xf]
        %v2701 = vld [vmem:[#allocation7 + $0x28] sm:$0xf]
        %v2702 = vld [vmem:[#allocation7 + $0x2c] sm:$0xf]
        %v2703 = vld [vmem:[#allocation7 + $0x30] sm:$0xf]
        %v2704 = vld [vmem:[#allocation7 + $0x34] sm:$0xf]
        %v2705 = vld [vmem:[#allocation7 + $0x38] sm:$0xf]
        %v2706 = vld [vmem:[#allocation7 + $0x3c] sm:$0xf]
        %v2707 = vld [vmem:[#allocation7 + $0x40] sm:$0xf]
        %v2708 = vld [vmem:[#allocation7 + $0x44] sm:$0xf]
        %v2709 = vld [vmem:[#allocation7 + $0x48] sm:$0xf]
        %v2710 = vld [vmem:[#allocation7 + $0x4c] sm:$0xf]
        %v2711 = vld [vmem:[#allocation7 + $0x50] sm:$0xf]
        %v2712 = vld [vmem:[#allocation7 + $0x54] sm:$0xf]
        %v2713 = vld [vmem:[#allocation7 + $0x58] sm:$0xf]
        %v2714 = vld [vmem:[#allocation7 + $0x5c] sm:$0xf]
        %v2715 = vld [vmem:[#allocation7 + $0x60] sm:$0xf]
        %v2716 = vld [vmem:[#allocation7 + $0x64] sm:$0xf]
        %v2717 = vld [vmem:[#allocation7 + $0x68] sm:$0xf]
        %v2718 = vld [vmem:[#allocation7 + $0x6c] sm:$0xf]
        %v2719 = vld [vmem:[#allocation7 + $0x70] sm:$0xf]
        %v2720 = vld [vmem:[#allocation7 + $0x74] sm:$0xf]
        %v2721 = vld [vmem:[#allocation7 + $0x78] sm:$0xf]
        %v2722 = vld [vmem:[#allocation7 + $0x7c] sm:$0xf]
        %v2723 = vld [vmem:[#allocation7 + $0x80] sm:$0xf]
        %v2724 = vld [vmem:[#allocation7 + $0x84] sm:$0xf]
        %v2725 = vld [vmem:[#allocation7 + $0x88] sm:$0xf]
        %v2726 = vld [vmem:[#allocation7 + $0x8c] sm:$0xf]
        %v2727 = vld [vmem:[#allocation7 + $0x90] sm:$0xf]
        %v2728 = vld [vmem:[#allocation7 + $0x94] sm:$0xf]
        %v2729 = vld [vmem:[#allocation7 + $0x98] sm:$0xf]
        %v2730 = vld [vmem:[#allocation7 + $0x9c] sm:$0xf]
        %v2731 = vld [vmem:[#allocation7 + $0xa0] sm:$0xf]
        %v2732 = vld [vmem:[#allocation7 + $0xa4] sm:$0xf]
        %v2733 = vld [vmem:[#allocation7 + $0xa8] sm:$0xf]
        %v2734 = vld [vmem:[#allocation7 + $0xac] sm:$0xf]
        %v2735 = vld [vmem:[#allocation7 + $0xb0] sm:$0xf]
        %v2736 = vld [vmem:[#allocation7 + $0xb4] sm:$0xf]
        %v2737 = vld [vmem:[#allocation7 + $0xb8] sm:$0xf]
        %v2738 = vld [vmem:[#allocation7 + $0xbc] sm:$0xf]
        %v2739 = vld [vmem:[#allocation7 + $0xc0] sm:$0xf]
        %v2740 = vld [vmem:[#allocation7 + $0xc4] sm:$0xf]
        %v2741 = vld [vmem:[#allocation7 + $0xc8] sm:$0xf]
        %v2742 = vld [vmem:[#allocation7 + $0xcc] sm:$0xf]
        %v2743 = vld [vmem:[#allocation7 + $0xd0] sm:$0xf]
        %v2744 = vld [vmem:[#allocation7 + $0xd4] sm:$0xf]
        %v2745 = vld [vmem:[#allocation7 + $0xd8] sm:$0xf]
        %v2746 = vld [vmem:[#allocation7 + $0xdc] sm:$0xf]
        %v2747 = vld [vmem:[#allocation7 + $0xe0] sm:$0xf]
        %v2748 = vld [vmem:[#allocation7 + $0xe4] sm:$0xf]
        %v2749 = vld [vmem:[#allocation7 + $0xe8] sm:$0xf]
        %v2750 = vld [vmem:[#allocation7 + $0xec] sm:$0xf]
        %v2751 = vld [vmem:[#allocation7 + $0xf0] sm:$0xf]
        %v2752 = vld [vmem:[#allocation7 + $0xf4] sm:$0xf]
        %v2753 = vld [vmem:[#allocation7 + $0xf8] sm:$0xf]
        %v2754 = vld [vmem:[#allocation7 + $0xfc] sm:$0xf]
        %v2755 = vld [vmem:[#allocation7 + $0x100] sm:$0xf]
        %v2756 = vld [vmem:[#allocation7 + $0x104] sm:$0xf]
        %v2757 = vld [vmem:[#allocation7 + $0x108] sm:$0xf]
        %v2758 = vld [vmem:[#allocation7 + $0x10c] sm:$0xf]
        %v2759 = vld [vmem:[#allocation7 + $0x110] sm:$0xf]
        %v2760 = vld [vmem:[#allocation7 + $0x114] sm:$0xf]
        %v2761 = vld [vmem:[#allocation7 + $0x118] sm:$0xf]
        %v2762 = vld [vmem:[#allocation7 + $0x11c] sm:$0xf]
        %v2763 = vld [vmem:[#allocation7 + $0x120] sm:$0xf]
        %v2764 = vld [vmem:[#allocation7 + $0x124] sm:$0xf]
        %v2765 = vld [vmem:[#allocation7 + $0x128] sm:$0xf]
        %v2766 = vld [vmem:[#allocation7 + $0x12c] sm:$0xf]
        %v2767 = vld [vmem:[#allocation7 + $0x130] sm:$0xf]
        %v2768 = vld [vmem:[#allocation7 + $0x134] sm:$0xf]
        %v2769 = vld [vmem:[#allocation7 + $0x138] sm:$0xf]
        %v2770 = vld [vmem:[#allocation7 + $0x13c] sm:$0xf]
        %v2771 = vld [vmem:[#allocation7 + $0x140] sm:$0xf]
        %v2772 = vld [vmem:[#allocation7 + $0x144] sm:$0xf]
        %v2773 = vld [vmem:[#allocation7 + $0x148] sm:$0xf]
        %v2774 = vld [vmem:[#allocation7 + $0x14c] sm:$0xf]
        %v2775 = vld [vmem:[#allocation7 + $0x150] sm:$0xf]
        %v2776 = vld [vmem:[#allocation7 + $0x154] sm:$0xf]
        %v2777 = vld [vmem:[#allocation7 + $0x158] sm:$0xf]
        %v2778 = vld [vmem:[#allocation7 + $0x15c] sm:$0xf]
        %v2779 = vld [vmem:[#allocation7 + $0x160] sm:$0xf]
        %v2780 = vld [vmem:[#allocation7 + $0x164] sm:$0xf]
        %v2781 = vld [vmem:[#allocation7 + $0x168] sm:$0xf]
        %v2782 = vld [vmem:[#allocation7 + $0x16c] sm:$0xf]
        %v2783 = vld [vmem:[#allocation7 + $0x170] sm:$0xf]
        %v2784 = vld [vmem:[#allocation7 + $0x174] sm:$0xf]
        %v2785 = vld [vmem:[#allocation7 + $0x178] sm:$0xf]
        %v2786 = vld [vmem:[#allocation7 + $0x17c] sm:$0xf]
        %v2883 = vunpack.c.l.b16 %v2691
        %v2884 = vunpack.c.l.b16 %v2692
        %v2885 = vunpack.c.l.b16 %v2693
        %v2886 = vunpack.c.l.b16 %v2694
        %v2887 = vunpack.c.l.b16 %v2695
        %v2888 = vunpack.c.l.b16 %v2696
        %v2889 = vunpack.c.l.b16 %v2697
        %v2890 = vunpack.c.l.b16 %v2698
        %v2891 = vunpack.c.l.b16 %v2699
        %v2892 = vunpack.c.l.b16 %v2700
        %v2893 = vunpack.c.l.b16 %v2701
        %v2894 = vunpack.c.l.b16 %v2702
        %v2895 = vunpack.c.l.b16 %v2703
        %v2896 = vunpack.c.l.b16 %v2704
        %v2897 = vunpack.c.l.b16 %v2705
        %v2898 = vunpack.c.l.b16 %v2706
        %v2899 = vunpack.c.l.b16 %v2707
        %v2900 = vunpack.c.l.b16 %v2708
        %v2901 = vunpack.c.l.b16 %v2709
        %v2902 = vunpack.c.l.b16 %v2710
        %v2903 = vunpack.c.l.b16 %v2711
        %v2904 = vunpack.c.l.b16 %v2712
        %v2905 = vunpack.c.l.b16 %v2713
        %v2906 = vunpack.c.l.b16 %v2714
        %v2907 = vunpack.c.l.b16 %v2715
        %v2908 = vunpack.c.l.b16 %v2716
        %v2909 = vunpack.c.l.b16 %v2717
        %v2910 = vunpack.c.l.b16 %v2718
        %v2911 = vunpack.c.l.b16 %v2719
        %v2912 = vunpack.c.l.b16 %v2720
        %v2913 = vunpack.c.l.b16 %v2721
        %v2914 = vunpack.c.l.b16 %v2722
        %v2915 = vunpack.c.l.b16 %v2723
        %v2916 = vunpack.c.l.b16 %v2724
        %v2917 = vunpack.c.l.b16 %v2725
        %v2918 = vunpack.c.l.b16 %v2726
        %v2919 = vunpack.c.l.b16 %v2727
        %v2920 = vunpack.c.l.b16 %v2728
        %v2921 = vunpack.c.l.b16 %v2729
        %v2922 = vunpack.c.l.b16 %v2730
        %v2923 = vunpack.c.l.b16 %v2731
        %v2924 = vunpack.c.l.b16 %v2732
        %v2925 = vunpack.c.l.b16 %v2733
        %v2926 = vunpack.c.l.b16 %v2734
        %v2927 = vunpack.c.l.b16 %v2735
        %v2928 = vunpack.c.l.b16 %v2736
        %v2929 = vunpack.c.l.b16 %v2737
        %v2930 = vunpack.c.l.b16 %v2738
        %v2931 = vunpack.c.l.b16 %v2739
        %v2932 = vunpack.c.l.b16 %v2740
        %v2933 = vunpack.c.l.b16 %v2741
        %v2934 = vunpack.c.l.b16 %v2742
        %v2935 = vunpack.c.l.b16 %v2743
        %v2936 = vunpack.c.l.b16 %v2744
        %v2937 = vunpack.c.l.b16 %v2745
        %v2938 = vunpack.c.l.b16 %v2746
        %v2939 = vunpack.c.l.b16 %v2747
        %v2940 = vunpack.c.l.b16 %v2748
        %v2941 = vunpack.c.l.b16 %v2749
        %v2942 = vunpack.c.l.b16 %v2750
        %v2943 = vunpack.c.l.b16 %v2751
        %v2944 = vunpack.c.l.b16 %v2752
        %v2945 = vunpack.c.l.b16 %v2753
        %v2946 = vunpack.c.l.b16 %v2754
        %v2947 = vunpack.c.l.b16 %v2755
        %v2948 = vunpack.c.l.b16 %v2756
        %v2949 = vunpack.c.l.b16 %v2757
        %v2950 = vunpack.c.l.b16 %v2758
        %v2951 = vunpack.c.l.b16 %v2759
        %v2952 = vunpack.c.l.b16 %v2760
        %v2953 = vunpack.c.l.b16 %v2761
        %v2954 = vunpack.c.l.b16 %v2762
        %v2955 = vunpack.c.l.b16 %v2763
        %v2956 = vunpack.c.l.b16 %v2764
        %v2957 = vunpack.c.l.b16 %v2765
        %v2958 = vunpack.c.l.b16 %v2766
        %v2959 = vunpack.c.l.b16 %v2767
        %v2960 = vunpack.c.l.b16 %v2768
        %v2961 = vunpack.c.l.b16 %v2769
        %v2962 = vunpack.c.l.b16 %v2770
        %v2963 = vunpack.c.l.b16 %v2771
        %v2964 = vunpack.c.l.b16 %v2772
        %v2965 = vunpack.c.l.b16 %v2773
        %v2966 = vunpack.c.l.b16 %v2774
        %v2967 = vunpack.c.l.b16 %v2775
        %v2968 = vunpack.c.l.b16 %v2776
        %v2969 = vunpack.c.l.b16 %v2777
        %v2970 = vunpack.c.l.b16 %v2778
        %v2971 = vunpack.c.l.b16 %v2779
        %v2972 = vunpack.c.l.b16 %v2780
        %v2973 = vunpack.c.l.b16 %v2781
        %v2974 = vunpack.c.l.b16 %v2782
        %v2975 = vunpack.c.l.b16 %v2783
        %v2976 = vunpack.c.l.b16 %v2784
        %v2977 = vunpack.c.l.b16 %v2785
        %v2978 = vunpack.c.l.b16 %v2786
        %v2979 = vpack.c.b16 %v2884, %v2883
        %v2980 = vpack.c.b16 %v2886, %v2885
        %v2981 = vpack.c.b16 %v2888, %v2887
        %v2982 = vpack.c.b16 %v2890, %v2889
        %v2983 = vpack.c.b16 %v2892, %v2891
        %v2984 = vpack.c.b16 %v2894, %v2893
        %v2985 = vpack.c.b16 %v2896, %v2895
        %v2986 = vpack.c.b16 %v2898, %v2897
        %v2987 = vpack.c.b16 %v2900, %v2899
        %v2988 = vpack.c.b16 %v2902, %v2901
        %v2989 = vpack.c.b16 %v2904, %v2903
        %v2990 = vpack.c.b16 %v2906, %v2905
        %v2991 = vpack.c.b16 %v2908, %v2907
        %v2992 = vpack.c.b16 %v2910, %v2909
        %v2993 = vpack.c.b16 %v2912, %v2911
        %v2994 = vpack.c.b16 %v2914, %v2913
        %v2995 = vpack.c.b16 %v2916, %v2915
        %v2996 = vpack.c.b16 %v2918, %v2917
        %v2997 = vpack.c.b16 %v2920, %v2919
        %v2998 = vpack.c.b16 %v2922, %v2921
        %v2999 = vpack.c.b16 %v2924, %v2923
        %v3000 = vpack.c.b16 %v2926, %v2925
        %v3001 = vpack.c.b16 %v2928, %v2927
        %v3002 = vpack.c.b16 %v2930, %v2929
        %v3003 = vpack.c.b16 %v2932, %v2931
        %v3004 = vpack.c.b16 %v2934, %v2933
        %v3005 = vpack.c.b16 %v2936, %v2935
        %v3006 = vpack.c.b16 %v2938, %v2937
        %v3007 = vpack.c.b16 %v2940, %v2939
        %v3008 = vpack.c.b16 %v2942, %v2941
        %v3009 = vpack.c.b16 %v2944, %v2943
        %v3010 = vpack.c.b16 %v2946, %v2945
        %v3011 = vpack.c.b16 %v2948, %v2947
        %v3012 = vpack.c.b16 %v2950, %v2949
        %v3013 = vpack.c.b16 %v2952, %v2951
        %v3014 = vpack.c.b16 %v2954, %v2953
        %v3015 = vpack.c.b16 %v2956, %v2955
        %v3016 = vpack.c.b16 %v2958, %v2957
        %v3017 = vpack.c.b16 %v2960, %v2959
        %v3018 = vpack.c.b16 %v2962, %v2961
        %v3019 = vpack.c.b16 %v2964, %v2963
        %v3020 = vpack.c.b16 %v2966, %v2965
        %v3021 = vpack.c.b16 %v2968, %v2967
        %v3022 = vpack.c.b16 %v2970, %v2969
        %v3023 = vpack.c.b16 %v2972, %v2971
        %v3024 = vpack.c.b16 %v2974, %v2973
        %v3025 = vpack.c.b16 %v2976, %v2975
        %v3026 = vpack.c.b16 %v2978, %v2977
        %3075 = vmatprep.subr.bf16.mxu0 0
        %3076 = vmatpush1.bf16.msra.mxu0 %v2979
        %3077 = vmatprep.subr.bf16.mxu0 0
        %3078 = vmatpush1.bf16.msra.mxu0 %v2980
        %3079 = vmatprep.subr.bf16.mxu0 0
        %3080 = vmatpush1.bf16.msra.mxu0 %v2981
        %3081 = vmatprep.subr.bf16.mxu0 0
        %3082 = vmatpush1.bf16.msra.mxu0 %v2982
        %3083 = vmatprep.subr.bf16.mxu0 0
        %3084 = vmatpush1.bf16.msra.mxu0 %v2983
        %3085 = vmatprep.subr.bf16.mxu0 0
        %3086 = vmatpush1.bf16.msra.mxu0 %v2984
        %3087 = vmatprep.subr.bf16.mxu0 0
        %3088 = vmatpush1.bf16.msra.mxu0 %v2985
        %3089 = vmatprep.subr.bf16.mxu0 0
        %3090 = vmatpush1.bf16.msra.mxu0 %v2986
        %3091 = vmatprep.subr.bf16.mxu0 0
        %3092 = vmatpush1.bf16.msra.mxu0 %v2987
        %3093 = vmatprep.subr.bf16.mxu0 0
        %3094 = vmatpush1.bf16.msra.mxu0 %v2988
        %3095 = vmatprep.subr.bf16.mxu0 0
        %3096 = vmatpush1.bf16.msra.mxu0 %v2989
        %3097 = vmatprep.subr.bf16.mxu0 0
        %3098 = vmatpush1.bf16.msra.mxu0 %v2990
        %3099 = vmatprep.subr.bf16.mxu0 0
        %3100 = vmatpush1.bf16.msra.mxu0 %v2991
        %3101 = vmatprep.subr.bf16.mxu0 0
        %3102 = vmatpush1.bf16.msra.mxu0 %v2992
        %3103 = vmatprep.subr.bf16.mxu0 0
        %3104 = vmatpush1.bf16.msra.mxu0 %v2993
        %3105 = vmatprep.subr.bf16.mxu0 0
        %3106 = vmatpush1.bf16.msra.mxu0 %v2994
        %3107 = vmatprep.mubr.bf16.mxu0 %v2668
        %3108 = vmatmul.mubr.bf16.gmra.mrb[0].mxu0 %v2667
        %v3109 = vpop.f32.mrb[0].mxu0
        %v3110 = vadd.f32 0.0, %v3109
        %v3111 = vpop.f32.mrb[0].mxu0
        %v3112 = vpop.f32.mrb[0].mxu0
        %v3113 = vadd.f32 0.0, %v3112
        %v3114 = vpop.f32.mrb[0].mxu0
        %3115 = vmatprep.mubr.bf16.mxu0 %v2674
        %3116 = vmatmul.mubr.bf16.gmra.mrb[0].mxu0 %v2673
        %v3117 = vpop.f32.mrb[0].mxu0
        %v3118 = vadd.f32 0.0, %v3117
        %v3119 = vpop.f32.mrb[0].mxu0
        %v3120 = vpop.f32.mrb[0].mxu0
        %v3121 = vadd.f32 0.0, %v3120
        %v3122 = vpop.f32.mrb[0].mxu0
        %3123 = vmatprep.mubr.bf16.mxu0 %v2680
        %3124 = vmatmul.mubr.bf16.gmra.mrb[0].mxu0 %v2679
        %v3125 = vpop.f32.mrb[0].mxu0
        %v3126 = vadd.f32 0.0, %v3125
        %v3127 = vpop.f32.mrb[0].mxu0
        %v3128 = vpop.f32.mrb[0].mxu0
        %v3129 = vadd.f32 0.0, %v3128
        %v3130 = vpop.f32.mrb[0].mxu0
        %3131 = vmatprep.mubr.bf16.mxu0 %v2686
        %3132 = vmatmul.mubr.bf16.gmra.mrb[0].mxu0 %v2685
        %v3133 = vpop.f32.mrb[0].mxu0
        %v3134 = vadd.f32 0.0, %v3133
        %v3135 = vpop.f32.mrb[0].mxu0
        %v3136 = vpop.f32.mrb[0].mxu0
        %v3137 = vadd.f32 0.0, %v3136
        %v3138 = vpop.f32.mrb[0].mxu0
        %3139 = vdwg.mxu0
        %3140 = vmatprep.subr.bf16.mxu0 0
        %3141 = vmatpush1.bf16.msra.mxu0 %v2995
        %3142 = vmatprep.subr.bf16.mxu0 0
        %3143 = vmatpush1.bf16.msra.mxu0 %v2996
        %3144 = vmatprep.subr.bf16.mxu0 0
        %3145 = vmatpush1.bf16.msra.mxu0 %v2997
        %3146 = vmatprep.subr.bf16.mxu0 0
        %3147 = vmatpush1.bf16.msra.mxu0 %v2998
        %3148 = vmatprep.subr.bf16.mxu0 0
        %3149 = vmatpush1.bf16.msra.mxu0 %v2999
        %3150 = vmatprep.subr.bf16.mxu0 0
        %3151 = vmatpush1.bf16.msra.mxu0 %v3000
        %3152 = vmatprep.subr.bf16.mxu0 0
        %3153 = vmatpush1.bf16.msra.mxu0 %v3001
        %3154 = vmatprep.subr.bf16.mxu0 0
        %3155 = vmatpush1.bf16.msra.mxu0 %v3002
        %3156 = vmatprep.subr.bf16.mxu0 0
        %3157 = vmatpush1.bf16.msra.mxu0 %v3003
        %3158 = vmatprep.subr.bf16.mxu0 0
        %3159 = vmatpush1.bf16.msra.mxu0 %v3004
        %3160 = vmatprep.subr.bf16.mxu0 0
        %3161 = vmatpush1.bf16.msra.mxu0 %v3005
        %3162 = vmatprep.subr.bf16.mxu0 0
        %3163 = vmatpush1.bf16.msra.mxu0 %v3006
        %3164 = vmatprep.subr.bf16.mxu0 0
        %3165 = vmatpush1.bf16.msra.mxu0 %v3007
        %3166 = vmatprep.subr.bf16.mxu0 0
        %3167 = vmatpush1.bf16.msra.mxu0 %v3008
        %3168 = vmatprep.subr.bf16.mxu0 0
        %3169 = vmatpush1.bf16.msra.mxu0 %v3009
        %3170 = vmatprep.subr.bf16.mxu0 0
        %3171 = vmatpush1.bf16.msra.mxu0 %v3010
        %3172 = vmatprep.mubr.bf16.mxu0 %v2670
        %3173 = vmatmul.mubr.bf16.gmra.mrb[0].mxu0 %v2669
        %v3174 = vpop.f32.mrb[0].mxu0
        %v3175 = vadd.f32 %v3110, %v3174
        %v3176 = vpop.f32.mrb[0].mxu0
        %v3177 = vpop.f32.mrb[0].mxu0
        %v3178 = vadd.f32 %v3113, %v3177
        %v3179 = vpop.f32.mrb[0].mxu0
        %3180 = vmatprep.mubr.bf16.mxu0 %v2676
        %3181 = vmatmul.mubr.bf16.gmra.mrb[0].mxu0 %v2675
        %v3182 = vpop.f32.mrb[0].mxu0
        %v3183 = vadd.f32 %v3118, %v3182
        %v3184 = vpop.f32.mrb[0].mxu0
        %v3185 = vpop.f32.mrb[0].mxu0
        %v3186 = vadd.f32 %v3121, %v3185
        %v3187 = vpop.f32.mrb[0].mxu0
        %3188 = vmatprep.mubr.bf16.mxu0 %v2682
        %3189 = vmatmul.mubr.bf16.gmra.mrb[0].mxu0 %v2681
        %v3190 = vpop.f32.mrb[0].mxu0
        %v3191 = vadd.f32 %v3126, %v3190
        %v3192 = vpop.f32.mrb[0].mxu0
        %v3193 = vpop.f32.mrb[0].mxu0
        %v3194 = vadd.f32 %v3129, %v3193
        %v3195 = vpop.f32.mrb[0].mxu0
        %3196 = vmatprep.mubr.bf16.mxu0 %v2688
        %3197 = vmatmul.mubr.bf16.gmra.mrb[0].mxu0 %v2687
        %v3198 = vpop.f32.mrb[0].mxu0
        %v3199 = vadd.f32 %v3134, %v3198
        %v3200 = vpop.f32.mrb[0].mxu0
        %v3201 = vpop.f32.mrb[0].mxu0
        %v3202 = vadd.f32 %v3137, %v3201
        %v3203 = vpop.f32.mrb[0].mxu0
        %3204 = vdwg.mxu0
        %3205 = vmatprep.subr.bf16.mxu0 0
        %3206 = vmatpush1.bf16.msra.mxu0 %v3011
        %3207 = vmatprep.subr.bf16.mxu0 0
        %3208 = vmatpush1.bf16.msra.mxu0 %v3012
        %3209 = vmatprep.subr.bf16.mxu0 0
        %3210 = vmatpush1.bf16.msra.mxu0 %v3013
        %3211 = vmatprep.subr.bf16.mxu0 0
        %3212 = vmatpush1.bf16.msra.mxu0 %v3014
        %3213 = vmatprep.subr.bf16.mxu0 0
        %3214 = vmatpush1.bf16.msra.mxu0 %v3015
        %3215 = vmatprep.subr.bf16.mxu0 0
        %3216 = vmatpush1.bf16.msra.mxu0 %v3016
        %3217 = vmatprep.subr.bf16.mxu0 0
        %3218 = vmatpush1.bf16.msra.mxu0 %v3017
        %3219 = vmatprep.subr.bf16.mxu0 0
        %3220 = vmatpush1.bf16.msra.mxu0 %v3018
        %3221 = vmatprep.subr.bf16.mxu0 0
        %3222 = vmatpush1.bf16.msra.mxu0 %v3019
        %3223 = vmatprep.subr.bf16.mxu0 0
        %3224 = vmatpush1.bf16.msra.mxu0 %v3020
        %3225 = vmatprep.subr.bf16.mxu0 0
        %3226 = vmatpush1.bf16.msra.mxu0 %v3021
        %3227 = vmatprep.subr.bf16.mxu0 0
        %3228 = vmatpush1.bf16.msra.mxu0 %v3022
        %3229 = vmatprep.subr.bf16.mxu0 0
        %3230 = vmatpush1.bf16.msra.mxu0 %v3023
        %3231 = vmatprep.subr.bf16.mxu0 0
        %3232 = vmatpush1.bf16.msra.mxu0 %v3024
        %3233 = vmatprep.subr.bf16.mxu0 0
        %3234 = vmatpush1.bf16.msra.mxu0 %v3025
        %3235 = vmatprep.subr.bf16.mxu0 0
        %3236 = vmatpush1.bf16.msra.mxu0 %v3026
        %3237 = vmatprep.mubr.bf16.mxu0 %v2672
        %3238 = vmatmul.mubr.bf16.gmra.mrb[0].mxu0 %v2671
        %v3239 = vpop.f32.mrb[0].mxu0
        %v3240 = vadd.f32 %v3175, %v3239
        %v3241 = vpop.f32.mrb[0].mxu0
        %v3242 = vpop.f32.mrb[0].mxu0
        %v3243 = vadd.f32 %v3178, %v3242
        %v3244 = vpop.f32.mrb[0].mxu0
        %3245 = vmatprep.mubr.bf16.mxu0 %v2678
        %3246 = vmatmul.mubr.bf16.gmra.mrb[0].mxu0 %v2677
        %v3247 = vpop.f32.mrb[0].mxu0
        %v3248 = vadd.f32 %v3183, %v3247
        %v3249 = vpop.f32.mrb[0].mxu0
        %v3250 = vpop.f32.mrb[0].mxu0
        %v3251 = vadd.f32 %v3186, %v3250
        %v3252 = vpop.f32.mrb[0].mxu0
        %3253 = vmatprep.mubr.bf16.mxu0 %v2684
        %3254 = vmatmul.mubr.bf16.gmra.mrb[0].mxu0 %v2683
        %v3255 = vpop.f32.mrb[0].mxu0
        %v3256 = vadd.f32 %v3191, %v3255
        %v3257 = vpop.f32.mrb[0].mxu0
        %v3258 = vpop.f32.mrb[0].mxu0
        %v3259 = vadd.f32 %v3194, %v3258
        %v3260 = vpop.f32.mrb[0].mxu0
        %3261 = vmatprep.mubr.bf16.mxu0 %v2690
        %3262 = vmatmul.mubr.bf16.gmra.mrb[0].mxu0 %v2689
        %v3263 = vpop.f32.mrb[0].mxu0
        %v3264 = vadd.f32 %v3199, %v3263
        %v3265 = vpop.f32.mrb[0].mxu0
        %v3266 = vpop.f32.mrb[0].mxu0
        %v3267 = vadd.f32 %v3202, %v3266
        %v3268 = vpop.f32.mrb[0].mxu0
        %3269 = vdwg.mxu0
        %v3270 = vadd.f32 %v2509, %v3240
        %v3271 = vadd.f32 %v2512, %v3243
        %v3272 = vadd.f32 %v2517, %v3248
        %v3273 = vadd.f32 %v2520, %v3251
        %v3274 = vadd.f32 %v2525, %v3256
        %v3275 = vadd.f32 %v2528, %v3259
        %v3276 = vadd.f32 %v2533, %v3264
        %v3277 = vadd.f32 %v2536, %v3267
        %v3278 = vld [vmem:[%s6] sm:$0x1]
        %v3280 = vlaneseq
        %v3281 = vshrl.u32 %v3280, 7
        %v3282 = vsub.s32 0, %v3281
        %v3283 = vrot.slane %v3278, %v3282
        %v3285 = vadd.f32 %v3270, %v3283
        %v3286 = vadd.f32 %v3271, %v3283
        %v3287 = vadd.f32 %v3272, %v3283
        %v3288 = vadd.f32 %v3273, %v3283
        %v3289 = vadd.f32 %v3274, %v3283
        %v3290 = vadd.f32 %v3275, %v3283
        %v3291 = vadd.f32 %v3276, %v3283
        %v3292 = vadd.f32 %v3277, %v3283
        %3293 = vst [vmem:[%s356] sm:$0xff] %v3285
        %3294 = vst [vmem:[%s356 + $0x8] sm:$0xff] %v3286
        %3295 = vst [vmem:[%s356 + $0x10] sm:$0xff] %v3287
        %3296 = vst [vmem:[%s356 + $0x18] sm:$0xff] %v3288
        %3297 = vst [vmem:[%s356 + $0x20] sm:$0xff] %v3289
        %3298 = vst [vmem:[%s356 + $0x28] sm:$0xff] %v3290
        %3299 = vst [vmem:[%s356 + $0x30] sm:$0xff] %v3291
        %3300 = vst [vmem:[%s356 + $0x38] sm:$0xff] %v3292
        %s3301 = sand.u32 %s188, 1
        %s3302 = scalar_lea.sflag [#allocation4], %s3301
        %s3303 = sand.u32 %s188, 1
        %s3304 = smul.addr %s3303, 96
        %s3305 = scalar_lea.vmem [#allocation8], %s3304
        %s3306 = sand.u32 %s214, 1
        %s3307 = scalar_lea.sflag [#allocation10], %s3306
        %s3308 = sand.u32 %s214, 1
        %s3309 = smul.addr %s3308, 64
        %s3310 = scalar_lea.vmem [#allocation9], %s3309
        // Predicated region
        $region61: #{tpu_custom_call.1} parent=47 // pred_check
          %p3311 = pneg %p198
        $region62: #{tpu_custom_call.1} parent=47 // pred_check_branch
          %3313 = sbr.rel (%p3311) target = $region64
        $region63: #{tpu_custom_call.1} parent=47 // pred_region
          %s3314 = smul.u32 8, %s28
          %s3316 = ssub.s32 1536, 1536
          %3317 = vsyncadd %s3302, %s3316
          %s3318 = smul.addr %s3314, 3
          %s3319 = smul.addr %s3318, 64
          %s3320 = scalar_lea.hbm %s7, %s3319
          %s3321 = sshll.u32 %s3305, 4
          %s3322 = int_to_ptr.vmem [resolvable:$true] %s3321
          %3327 = dma.vmem_to_hbm [thread:$0]  %s3322, 1536, %s3320, %s3302, 192, 192, 12
        $region64: #{tpu_custom_call.1} parent=47 // pred_fallthru
          _
        // Predicated region
        $region65: #{tpu_custom_call.1} parent=47 // pred_check
          %p3328 = pneg %p224
        $region66: #{tpu_custom_call.1} parent=47 // pred_check_branch
          %3330 = sbr.rel (%p3328) target = $region68
        $region67: #{tpu_custom_call.1} parent=47 // pred_region
          %s3331 = smul.u32 8, %s28
          %s3333 = ssub.s32 1024, 1024
          %3334 = vsyncadd %s3307, %s3333
          %s3335 = smul.addr %s3331, 128
          %s3336 = scalar_lea.hbm %s8, %s3335
          %s3337 = sshll.u32 %s3310, 4
          %s3338 = int_to_ptr.vmem [resolvable:$true] %s3337
          %3343 = dma.vmem_to_hbm [thread:$0]  %s3338, 1024, %s3336, %s3307, 128, 128, 8
        $region68: #{tpu_custom_call.1} parent=47 // pred_fallthru
          _
      $region48: #{tpu_custom_call.1} parent=5 // pred_fallthru
        _
      %p3344 = scmp.le.s32.totalorder 2, %s23
      // Predicated region
      $region69: #{tpu_custom_call.1} parent=5 // pred_check
        %p3345 = pneg %p3344
      $region70: #{tpu_custom_call.1} parent=5 // pred_check_branch
        %3347 = sbr.rel (%p3345) target = $region72
      $region71: #{tpu_custom_call.1} parent=5 // pred_region
        %s3348 = ssub.s32 %s23, 2
        // Predicated region
        $region73: #{tpu_custom_call.1} parent=71 // pred_check
          %p3349 = pneg %p204
        $region74: #{tpu_custom_call.1} parent=71 // pred_check_branch
          %3351 = sbr.rel (%p3349) target = $region76
        $region75: #{tpu_custom_call.1} parent=71 // pred_region
          %s3352 = sand.u32 %s189, 1
          %s3353 = scalar_lea.sflag [#allocation4], %s3352
          %s3354 = sand.u32 %s189, 1
          %s3355 = smul.addr %s3354, 96
          %s3356 = scalar_lea.vmem [#allocation8], %s3355
          %3357 = dma.done %s3353, 1536
        $region76: #{tpu_custom_call.1} parent=71 // pred_fallthru
          _
        // Predicated region
        $region77: #{tpu_custom_call.1} parent=71 // pred_check
          %p3358 = pneg %p230
        $region78: #{tpu_custom_call.1} parent=71 // pred_check_branch
          %3360 = sbr.rel (%p3358) target = $region80
        $region79: #{tpu_custom_call.1} parent=71 // pred_region
          %s3361 = sand.u32 %s215, 1
          %s3362 = scalar_lea.sflag [#allocation10], %s3361
          %s3363 = sand.u32 %s215, 1
          %s3364 = smul.addr %s3363, 64
          %s3365 = scalar_lea.vmem [#allocation9], %s3364
          %3366 = dma.done %s3362, 1024
        $region80: #{tpu_custom_call.1} parent=71 // pred_fallthru
          _
      $region72: #{tpu_custom_call.1} parent=5 // pred_fallthru
        _
    $region6: #{tpu_custom_call.1} parent=1 // loop_footer
      %s27 = sadd.s32 1, %s23
    $region7: #{tpu_custom_call.1} parent=1 // loop_footer_branch
      %22 = sbr.rel target = $region3
    $region8: #{tpu_custom_call.1} parent=1 // loop_exit
      _
    %3367 = vsyncpa [#allocation3], 1
    %s3368 = scalar_lea.sflag [#allocation3], 1
    %3369 = vsyncpa %s3368, 1
    %3370 = vsyncpa [#allocation6], 1
    %3371 = vsyncpa [#allocation4], 1
    %s3372 = scalar_lea.sflag [#allocation4], 1
    %3373 = vsyncpa %s3372, 1
    %3374 = vsyncpa [#allocation10], 1
    %s3375 = scalar_lea.sflag [#allocation10], 1
    %3376 = vsyncpa %s3375, 1

</llo_original>
